<compile_context>
chip_gen: v6e
topology: v6e:2x2x1
jax: 0.10.0
libtpu: 0.0.40
codegen_flags: <defaults>
</compile_context>

<pallas_src>
import functools

import jax
import jax.numpy as jnp
from jax.experimental import pallas as pl
from jax.experimental.pallas import tpu as pltpu

# ----- config (CFG stand-ins, small demo sizes) -----
BATCH = 8
C_IMG, H_IMG, W_IMG = 4, 16, 16
IMAGE_EMBEDDING = 32       # CFG.image_embedding
SPOT_EMBEDDING = 32        # CFG.spot_embedding
PROJECTION_DIM = 128       # CFG.projection_dim
KAN_DIM = 64               # C_in inside ProjectionHead
KAN_PAD = 128              # lane-dense padding of the KAN/fc_in width
IMG_FEAT_PAD = 128         # lane-dense padding of the encoder feature width
TEMPERATURE = 1.0          # CFG.temperature
LN_EPS = 1e-5
_INV_SQRT2 = 0.7071067811865476

# slab packing relies on a single 128-lane column width everywhere
assert PROJECTION_DIM == 128 and KAN_PAD == 128 and IMG_FEAT_PAD == 128


def _vmem():
    return pl.BlockSpec(memory_space=pltpu.MemorySpace.VMEM)


# ---------------- in-kernel math helpers ----------------

def _erf(x):
    # Abramowitz & Stegun 7.1.26 rational approximation; the 1/(1+p|x|) divide
    # is pushed to the EUP slot with an approximate reciprocal.
    p = 0.3275911
    a1, a2, a3, a4, a5 = (0.254829592, -0.284496736, 1.421413741,
                          -1.453152027, 1.061405429)
    ax = jnp.abs(x)
    t = pl.reciprocal(1.0 + p * ax, approx=True)
    poly = ((((a5 * t + a4) * t + a3) * t + a2) * t + a1) * t
    y = 1.0 - poly * jnp.exp(-(ax * ax))
    return jnp.where(x >= 0, y, -y)


def _gelu_exact(x):
    # nn.GELU() default (erf form)
    return 0.5 * x * (1.0 + _erf(x * _INV_SQRT2))


def _silu(x):
    return x * pl.reciprocal(1.0 + jnp.exp(-x), approx=True)


def _softmax_rows(x):
    m = jnp.max(x, axis=-1, keepdims=True)
    e = jnp.exp(x - m)
    return e * pl.reciprocal(jnp.sum(e, axis=-1, keepdims=True), approx=True)


def _log_softmax(x, axis):
    m = jnp.max(x, axis=axis, keepdims=True)
    s = x - m
    return s - jnp.log(jnp.sum(jnp.exp(s), axis=axis, keepdims=True))


def _projection_head(x, w_ref, v_ref, e_dim):
    # w_ref (bf16): packed [wp (e_dim,128); fc_in (128,128); kan_base (128,128);
    #                       fc_out (128,128)]  (zero-padded -> math identical)
    # v_ref (f32, 8x128): rows = [extra, bp, b_fc_in, b_kan, b_fc_out, gamma, beta, 0]
    o1 = e_dim
    o2 = o1 + PROJECTION_DIM
    o3 = o2 + KAN_PAD
    o4 = o3 + KAN_PAD
    wp = w_ref[0:o1, :]
    wfi = w_ref[o1:o2, :]
    wk = w_ref[o2:o3, :]
    wfo = w_ref[o3:o4, :]
    bp = v_ref[1:2, :]
    bfi = v_ref[2:3, :]
    bk = v_ref[3:4, :]
    bfo = v_ref[4:5, :]
    gamma = v_ref[5:6, :]
    beta = v_ref[6:7, :]

    # bf16 MXU inputs, f32 accumulation.
    projected = jnp.dot(x.astype(jnp.bfloat16), wp,
                        preferred_element_type=jnp.float32) + bp
    h = _gelu_exact(projected)                            # nn.GELU() (exact erf)
    h = jnp.dot(h.astype(jnp.bfloat16), wfi,
                preferred_element_type=jnp.float32) + bfi
    # KAN(width=[64, 64]) -- base path only (SiLU + linear), zero-padded to 128.
    # TODO(synk): B-spline branch of the KAN layer has no clean Pallas port; omitted.
    h = jnp.dot(_silu(h).astype(jnp.bfloat16), wk,
                preferred_element_type=jnp.float32) + bk
    h = jnp.dot(h.astype(jnp.bfloat16), wfo,
                preferred_element_type=jnp.float32) + bfo
    # dropout is identity at inference
    h = h + projected
    # LayerNorm in f32
    mean = jnp.mean(h, axis=-1, keepdims=True)
    var = jnp.mean(jnp.square(h - mean), axis=-1, keepdims=True)
    h = (h - mean) * jax.lax.rsqrt(var + LN_EPS)
    return h * gamma + beta


# ---------------- fused kernel ----------------

def clip_fused_kernel(pooled_ref, spot_ref, enc_w_ref, iw_ref, iv_ref,
                      sw_ref, sv_ref, loss_ref, *, temperature, batch_size):
    # --- image encoder surrogate: linear(H -> IMAGE_EMBEDDING) on the image
    #     already mean-pooled over (C, W) in the wrapper (encoder bias lives in
    #     row 0 of the image vector slab) ---
    # TODO(synk): the real timm CFG.model_name backbone + torch.load checkpoint
    # has no in-script Pallas equivalent; replaced with a pool+linear surrogate.
    img_feat = (jnp.dot(pooled_ref[...], enc_w_ref[...],
                        preferred_element_type=jnp.float32) + iv_ref[0:1, :])

    # --- projection heads (SpotEncoder == identity) ---
    image_emb = _projection_head(img_feat, iw_ref, iv_ref, IMG_FEAT_PAD)
    spot_emb = _projection_head(spot_ref[...], sw_ref, sv_ref, SPOT_EMBEDDING)

    # --- symmetric CLIP loss, transpose-free formulation (f32 throughout) ---
    inv_t = 1.0 / temperature
    dn = (((1,), (1,)), ((), ()))        # contract last axes == a @ b.T, no XLU .T
    logits = jax.lax.dot_general(spot_emb, image_emb, dn,
                                 preferred_element_type=jnp.float32) * inv_t
    images_sim = jax.lax.dot_general(image_emb, image_emb, dn,
                                     preferred_element_type=jnp.float32)
    spots_sim = jax.lax.dot_general(spot_emb, spot_emb, dn,
                                    preferred_element_type=jnp.float32)
    # matches the module: softmax((images_sim + spots_sim) / 2 / temperature)
    targets = _softmax_rows((images_sim + spots_sim) * (0.5 * inv_t))

    # spots_loss uses log_softmax over rows; images_loss (== cross_entropy of
    # logits.T vs targets.T) is identical to using column-wise log_softmax.
    # At B=8 the axis-0 sublane reduction is negligible; revisit if batch-tiled.
    ls_rows = _log_softmax(logits, axis=-1)
    ls_cols = _log_softmax(logits, axis=0)
    per_entry = -targets * (ls_rows + ls_cols)
    total = jnp.sum(jnp.sum(per_entry, axis=-1, keepdims=True),
                    axis=0, keepdims=True)                 # (1, 1)
    # (1,1) VMEM output kept deliberately (safest lowering for a scalar result).
    loss_ref[...] = total * (0.5 / batch_size)


# ---------------- wrapper ----------------

def run_clip_fused(pooled, spot, enc_w, img_w, img_v, spot_w, spot_v,
                   temperature):
    bsz = pooled.shape[0]
    head_flops = (PROJECTION_DIM * KAN_PAD + KAN_PAD * KAN_PAD
                  + KAN_PAD * PROJECTION_DIM)
    matmul_flops = 2 * bsz * (
        H_IMG * IMG_FEAT_PAD
        + IMG_FEAT_PAD * PROJECTION_DIM + head_flops
        + SPOT_EMBEDDING * PROJECTION_DIM + head_flops
        + 3 * bsz * PROJECTION_DIM)
    transcend = 4 * bsz * (PROJECTION_DIM + KAN_PAD) + 5 * bsz * bsz
    args = (pooled, spot, enc_w, img_w, img_v, spot_w, spot_v)
    bytes_accessed = sum(int(a.size) * a.dtype.itemsize for a in args) + 4
    cost = pl.CostEstimate(flops=int(matmul_flops),
                           transcendentals=int(transcend),
                           bytes_accessed=int(bytes_accessed))
    loss = pl.pallas_call(
        functools.partial(clip_fused_kernel, temperature=temperature,
                          batch_size=bsz),
        out_shape=jax.ShapeDtypeStruct((1, 1), jnp.float32),
        in_specs=[_vmem()] * 7,
        out_specs=_vmem(),
        cost_estimate=cost,
    )(*args)
    return loss[0, 0]


# ---------------- parameter init & host-side packing ----------------

def _pad2d(x, rows, cols):
    out = jnp.zeros((rows, cols), jnp.float32)
    return out.at[: x.shape[0], : x.shape[1]].set(x)


def init_linear(key, d_in, d_out):
    kw, kb = jax.random.split(key)
    scale = 1.0 / jnp.sqrt(float(d_in))
    # weights stored (in, out) so kernels do x @ W (== PyTorch x @ W.T)
    w = jax.random.uniform(kw, (d_in, d_out), jnp.float32, -scale, scale)
    b = jax.random.uniform(kb, (1, d_out), jnp.float32, -scale, scale)
    return w, b


def init_projection_head_params(key, embedding_dim):
    ks = jax.random.split(key, 4)
    wp, bp = init_linear(ks[0], embedding_dim, PROJECTION_DIM)      # projection
    wfi, bfi = init_linear(ks[1], PROJECTION_DIM, KAN_DIM)          # fc_in
    wk, bk = init_linear(ks[2], KAN_DIM, KAN_DIM)                   # KAN base
    wfo, bfo = init_linear(ks[3], KAN_DIM, PROJECTION_DIM)          # fc_out
    gamma = jnp.ones((1, PROJECTION_DIM), jnp.float32)              # LayerNorm
    beta = jnp.zeros((1, PROJECTION_DIM), jnp.float32)
    return (wp, bp, wfi, bfi, wk, bk, wfo, bfo, gamma, beta)


def pack_projection_head(params, pad_in_to, extra_row=None):
    """Pack head params into one bf16 weight slab and one (8,128) f32 slab.

    Zero padding of the 64-wide KAN path (and of the projection input when
    pad_in_to > embedding_dim) is mathematically a no-op but makes every
    matmul lane-dense.  Slab row counts (512 / 416) are multiples of 16, so
    bf16 sublane packing and the in-kernel static slices stay aligned.
    """
    wp, bp, wfi, bfi, wk, bk, wfo, bfo, gamma, beta = params
    wp_p = _pad2d(wp, pad_in_to, PROJECTION_DIM)
    wfi_p = _pad2d(wfi, PROJECTION_DIM, KAN_PAD)
    bfi_p = _pad2d(bfi, 1, KAN_PAD)
    wk_p = _pad2d(wk, KAN_PAD, KAN_PAD)
    bk_p = _pad2d(bk, 1, KAN_PAD)
    wfo_p = _pad2d(wfo, KAN_PAD, PROJECTION_DIM)
    w_slab = jnp.concatenate([wp_p, wfi_p, wk_p, wfo_p],
                             axis=0).astype(jnp.bfloat16)
    if extra_row is None:
        extra_row = jnp.zeros((1, PROJECTION_DIM), jnp.float32)
    v_slab = jnp.concatenate(
        [extra_row, bp, bfi_p, bk_p, bfo, gamma, beta,
         jnp.zeros((1, PROJECTION_DIM), jnp.float32)], axis=0)       # (8, 128)
    return w_slab, v_slab


def pack_encoder_weights(w, b):
    """Pad the (H, IMAGE_EMBEDDING) surrogate encoder weight to 128 lanes and
    cast to bf16; bias padded to (1,128) f32 (stored in row 0 of the image
    vector slab).  The old rank-16 (C*H*W, 128) folded weight is gone: the
    (C, W) mean-pool now happens in the wrapper as a plain reduce."""
    w_pad = _pad2d(w, H_IMG, IMG_FEAT_PAD).astype(jnp.bfloat16)
    b_pad = _pad2d(b, 1, IMG_FEAT_PAD)
    return w_pad, b_pad


# ---------------- CLIPModel.forward ----------------

def clip_forward(batch, params):
    image = batch["image"]                       # (B, C, H, W), NCHW float32
    # permute(0,2,1,3) + the surrogate encoder's global average pool reduce
    # over (C, W); done here as one cheap mean (no transpose, no folded weight).
    pooled = jnp.mean(image, axis=(1, 3)).astype(jnp.bfloat16)       # (B, H)
    spot = batch["reduced_expression"].astype(jnp.bfloat16)          # SpotEncoder == identity
    return run_clip_fused(pooled, spot, params["enc_w"],
                          params["img_w"], params["img_v"],
                          params["spot_w"], params["spot_v"], TEMPERATURE)


if __name__ == "__main__":
    key = jax.random.PRNGKey(0)
    k_img, k_spot, k_enc, k_ip, k_sp = jax.random.split(key, 5)
    image = jax.random.normal(k_img, (BATCH, C_IMG, H_IMG, W_IMG), jnp.float32)
    spots = jax.random.normal(k_spot, (BATCH, SPOT_EMBEDDING), jnp.float32)

    enc_w_raw, enc_b_raw = init_linear(k_enc, H_IMG, IMAGE_EMBEDDING)
    enc_w, enc_b_pad = pack_encoder_weights(enc_w_raw, enc_b_raw)

    img_head = init_projection_head_params(k_ip, IMAGE_EMBEDDING)
    spot_head = init_projection_head_params(k_sp, SPOT_EMBEDDING)
    img_w, img_v = pack_projection_head(img_head, pad_in_to=IMG_FEAT_PAD,
                                        extra_row=enc_b_pad)
    spot_w, spot_v = pack_projection_head(spot_head, pad_in_to=SPOT_EMBEDDING,
                                          extra_row=None)

    params = {"enc_w": enc_w,
              "img_w": img_w, "img_v": img_v,
              "spot_w": spot_w, "spot_v": spot_v}

    loss = clip_forward({"image": image, "reduced_expression": spots}, params)
    jax.block_until_ready(loss)
    assert loss.shape == () and bool(jnp.isfinite(loss))
    print("KERNEL_OK")
</pallas_src>

<mosaic_0001>
module attributes {stable_mosaic.version = 11 : i64} {
  func.func @clip_fused_kernel(%arg0: memref<8x16xbf16, #tpu.memory_space<vmem>>, %arg1: memref<8x32xbf16, #tpu.memory_space<vmem>>, %arg2: memref<16x128xbf16, #tpu.memory_space<vmem>>, %arg3: memref<512x128xbf16, #tpu.memory_space<vmem>>, %arg4: memref<8x128xf32, #tpu.memory_space<vmem>>, %arg5: memref<416x128xbf16, #tpu.memory_space<vmem>>, %arg6: memref<8x128xf32, #tpu.memory_space<vmem>>, %arg7: memref<1x1xf32, #tpu.memory_space<vmem>>) attributes {dimension_semantics = [], scalar_prefetch = 0 : i64, scratch_operands = 0 : i64, tpu.core_type = #tpu.core_type<tc>} {
    %c0 = arith.constant 0 : index
    %c0_0 = arith.constant 0 : index
    %0 = vector.load %arg0[%c0, %c0_0] : memref<8x16xbf16, #tpu.memory_space<vmem>>, vector<8x16xbf16>
    %c0_1 = arith.constant 0 : index
    %c0_2 = arith.constant 0 : index
    %1 = vector.load %arg2[%c0_1, %c0_2] : memref<16x128xbf16, #tpu.memory_space<vmem>>, vector<16x128xbf16>
    %cst = arith.constant dense<0.000000e+00> : vector<8x128xf32>
    %2 = tpu.matmul %0, %1, %cst {dimension_numbers = #tpu.dot_dimension_numbers<[1], [0], [0], [1], [0, 0, 1, 1], [], []>} : vector<8x16xbf16>, vector<16x128xbf16>, vector<8x128xf32> -> vector<8x128xf32>
    %c0_3 = arith.constant 0 : index
    %c0_4 = arith.constant 0 : index
    %3 = vector.load %arg4[%c0_3, %c0_4] : memref<8x128xf32, #tpu.memory_space<vmem>>, vector<1x128xf32>
    %4 = vector.broadcast %3 : vector<1x128xf32> to vector<8x128xf32>
    %5 = arith.addf %2, %4 : vector<8x128xf32>
    %c0_5 = arith.constant 0 : index
    %c0_6 = arith.constant 0 : index
    %6 = vector.load %arg3[%c0_5, %c0_6] : memref<512x128xbf16, #tpu.memory_space<vmem>>, vector<128x128xbf16>
    %c128 = arith.constant 128 : index
    %c0_7 = arith.constant 0 : index
    %7 = vector.load %arg3[%c128, %c0_7] : memref<512x128xbf16, #tpu.memory_space<vmem>>, vector<128x128xbf16>
    %c256 = arith.constant 256 : index
    %c0_8 = arith.constant 0 : index
    %8 = vector.load %arg3[%c256, %c0_8] : memref<512x128xbf16, #tpu.memory_space<vmem>>, vector<128x128xbf16>
    %c384 = arith.constant 384 : index
    %c0_9 = arith.constant 0 : index
    %9 = vector.load %arg3[%c384, %c0_9] : memref<512x128xbf16, #tpu.memory_space<vmem>>, vector<128x128xbf16>
    %c1 = arith.constant 1 : index
    %c0_10 = arith.constant 0 : index
    %10 = vector.load %arg4[%c1, %c0_10] : memref<8x128xf32, #tpu.memory_space<vmem>>, vector<1x128xf32>
    %c2 = arith.constant 2 : index
    %c0_11 = arith.constant 0 : index
    %11 = vector.load %arg4[%c2, %c0_11] : memref<8x128xf32, #tpu.memory_space<vmem>>, vector<1x128xf32>
    %c3 = arith.constant 3 : index
    %c0_12 = arith.constant 0 : index
    %12 = vector.load %arg4[%c3, %c0_12] : memref<8x128xf32, #tpu.memory_space<vmem>>, vector<1x128xf32>
    %c4 = arith.constant 4 : index
    %c0_13 = arith.constant 0 : index
    %13 = vector.load %arg4[%c4, %c0_13] : memref<8x128xf32, #tpu.memory_space<vmem>>, vector<1x128xf32>
    %c5 = arith.constant 5 : index
    %c0_14 = arith.constant 0 : index
    %14 = vector.load %arg4[%c5, %c0_14] : memref<8x128xf32, #tpu.memory_space<vmem>>, vector<1x128xf32>
    %c6 = arith.constant 6 : index
    %c0_15 = arith.constant 0 : index
    %15 = vector.load %arg4[%c6, %c0_15] : memref<8x128xf32, #tpu.memory_space<vmem>>, vector<1x128xf32>
    %16 = arith.truncf %5 : vector<8x128xf32> to vector<8x128xbf16>
    %cst_16 = arith.constant dense<0.000000e+00> : vector<8x128xf32>
    %17 = tpu.matmul %16, %6, %cst_16 {dimension_numbers = #tpu.dot_dimension_numbers<[1], [0], [0], [1], [0, 0, 1, 1], [], []>} : vector<8x128xbf16>, vector<128x128xbf16>, vector<8x128xf32> -> vector<8x128xf32>
    %18 = vector.broadcast %10 : vector<1x128xf32> to vector<8x128xf32>
    %19 = arith.addf %17, %18 : vector<8x128xf32>
    %cst_17 = arith.constant 5.000000e-01 : f32
    %20 = vector.broadcast %cst_17 : f32 to vector<8x128xf32>
    %21 = arith.mulf %20, %19 : vector<8x128xf32>
    %cst_18 = arith.constant 0.707106769 : f32
    %22 = vector.broadcast %cst_18 : f32 to vector<8x128xf32>
    %23 = arith.mulf %19, %22 : vector<8x128xf32>
    %24 = math.absf %23 : vector<8x128xf32>
    %cst_19 = arith.constant 0.327591091 : f32
    %25 = vector.broadcast %cst_19 : f32 to vector<8x128xf32>
    %26 = arith.mulf %25, %24 : vector<8x128xf32>
    %cst_20 = arith.constant 1.000000e+00 : f32
    %27 = vector.broadcast %cst_20 : f32 to vector<8x128xf32>
    %28 = arith.addf %27, %26 : vector<8x128xf32>
    %29 = tpu.reciprocal %28 {approx = true} : vector<8x128xf32> -> vector<8x128xf32>
    %cst_21 = arith.constant 1.06140542 : f32
    %30 = vector.broadcast %cst_21 : f32 to vector<8x128xf32>
    %31 = arith.mulf %30, %29 : vector<8x128xf32>
    %cst_22 = arith.constant -1.45315206 : f32
    %32 = vector.broadcast %cst_22 : f32 to vector<8x128xf32>
    %33 = arith.addf %31, %32 : vector<8x128xf32>
    %34 = arith.mulf %33, %29 : vector<8x128xf32>
    %cst_23 = arith.constant 1.42141378 : f32
    %35 = vector.broadcast %cst_23 : f32 to vector<8x128xf32>
    %36 = arith.addf %34, %35 : vector<8x128xf32>
    %37 = arith.mulf %36, %29 : vector<8x128xf32>
    %cst_24 = arith.constant -0.284496725 : f32
    %38 = vector.broadcast %cst_24 : f32 to vector<8x128xf32>
    %39 = arith.addf %37, %38 : vector<8x128xf32>
    %40 = arith.mulf %39, %29 : vector<8x128xf32>
    %cst_25 = arith.constant 0.254829586 : f32
    %41 = vector.broadcast %cst_25 : f32 to vector<8x128xf32>
    %42 = arith.addf %40, %41 : vector<8x128xf32>
    %43 = arith.mulf %42, %29 : vector<8x128xf32>
    %44 = arith.mulf %24, %24 : vector<8x128xf32>
    %cst_26 = arith.constant 0.000000e+00 : f32
    %45 = vector.broadcast %cst_26 : f32 to vector<8x128xf32>
    %46 = arith.subf %45, %44 : vector<8x128xf32>
    %47 = math.exp %46 : vector<8x128xf32>
    %48 = arith.mulf %43, %47 : vector<8x128xf32>
    %cst_27 = arith.constant 1.000000e+00 : f32
    %49 = vector.broadcast %cst_27 : f32 to vector<8x128xf32>
    %50 = arith.subf %49, %48 : vector<8x128xf32>
    %cst_28 = arith.constant 0.000000e+00 : f32
    %51 = vector.broadcast %cst_28 : f32 to vector<8x128xf32>
    %52 = arith.cmpf oge, %23, %51 : vector<8x128xf32>
    %cst_29 = arith.constant 0.000000e+00 : f32
    %53 = vector.broadcast %cst_29 : f32 to vector<8x128xf32>
    %54 = arith.subf %53, %50 : vector<8x128xf32>
    %55 = arith.select %52, %50, %54 : vector<8x128xi1>, vector<8x128xf32>
    %cst_30 = arith.constant 1.000000e+00 : f32
    %56 = vector.broadcast %cst_30 : f32 to vector<8x128xf32>
    %57 = arith.addf %56, %55 : vector<8x128xf32>
    %58 = arith.mulf %21, %57 : vector<8x128xf32>
    %59 = arith.truncf %58 : vector<8x128xf32> to vector<8x128xbf16>
    %cst_31 = arith.constant dense<0.000000e+00> : vector<8x128xf32>
    %60 = tpu.matmul %59, %7, %cst_31 {dimension_numbers = #tpu.dot_dimension_numbers<[1], [0], [0], [1], [0, 0, 1, 1], [], []>} : vector<8x128xbf16>, vector<128x128xbf16>, vector<8x128xf32> -> vector<8x128xf32>
    %61 = vector.broadcast %11 : vector<1x128xf32> to vector<8x128xf32>
    %62 = arith.addf %60, %61 : vector<8x128xf32>
    %cst_32 = arith.constant 0.000000e+00 : f32
    %63 = vector.broadcast %cst_32 : f32 to vector<8x128xf32>
    %64 = arith.subf %63, %62 : vector<8x128xf32>
    %65 = math.exp %64 : vector<8x128xf32>
    %cst_33 = arith.constant 1.000000e+00 : f32
    %66 = vector.broadcast %cst_33 : f32 to vector<8x128xf32>
    %67 = arith.addf %66, %65 : vector<8x128xf32>
    %68 = tpu.reciprocal %67 {approx = true} : vector<8x128xf32> -> vector<8x128xf32>
    %69 = arith.mulf %62, %68 : vector<8x128xf32>
    %70 = arith.truncf %69 : vector<8x128xf32> to vector<8x128xbf16>
    %cst_34 = arith.constant dense<0.000000e+00> : vector<8x128xf32>
    %71 = tpu.matmul %70, %8, %cst_34 {dimension_numbers = #tpu.dot_dimension_numbers<[1], [0], [0], [1], [0, 0, 1, 1], [], []>} : vector<8x128xbf16>, vector<128x128xbf16>, vector<8x128xf32> -> vector<8x128xf32>
    %72 = vector.broadcast %12 : vector<1x128xf32> to vector<8x128xf32>
    %73 = arith.addf %71, %72 : vector<8x128xf32>
    %74 = arith.truncf %73 : vector<8x128xf32> to vector<8x128xbf16>
    %cst_35 = arith.constant dense<0.000000e+00> : vector<8x128xf32>
    %75 = tpu.matmul %74, %9, %cst_35 {dimension_numbers = #tpu.dot_dimension_numbers<[1], [0], [0], [1], [0, 0, 1, 1], [], []>} : vector<8x128xbf16>, vector<128x128xbf16>, vector<8x128xf32> -> vector<8x128xf32>
    %76 = vector.broadcast %13 : vector<1x128xf32> to vector<8x128xf32>
    %77 = arith.addf %75, %76 : vector<8x128xf32>
    %78 = arith.addf %77, %19 : vector<8x128xf32>
    %cst_36 = arith.constant dense<0.000000e+00> : vector<8xf32>
    %79 = vector.multi_reduction <add>, %78, %cst_36 [1] : vector<8x128xf32> to vector<8xf32>
    %80 = vector.shape_cast %79 : vector<8xf32> to vector<8x1xf32>
    %cst_37 = arith.constant 1.280000e+02 : f32
    %81 = vector.broadcast %cst_37 : f32 to vector<8x1xf32>
    %82 = arith.divf %80, %81 : vector<8x1xf32>
    %83 = vector.broadcast %82 : vector<8x1xf32> to vector<8x128xf32>
    %84 = arith.subf %78, %83 : vector<8x128xf32>
    %85 = arith.mulf %84, %84 : vector<8x128xf32>
    %cst_38 = arith.constant dense<0.000000e+00> : vector<8xf32>
    %86 = vector.multi_reduction <add>, %85, %cst_38 [1] : vector<8x128xf32> to vector<8xf32>
    %87 = vector.shape_cast %86 : vector<8xf32> to vector<8x1xf32>
    %cst_39 = arith.constant 1.280000e+02 : f32
    %88 = vector.broadcast %cst_39 : f32 to vector<8x1xf32>
    %89 = arith.divf %87, %88 : vector<8x1xf32>
    %90 = vector.broadcast %82 : vector<8x1xf32> to vector<8x128xf32>
    %91 = arith.subf %78, %90 : vector<8x128xf32>
    %cst_40 = arith.constant 9.99999974E-6 : f32
    %92 = vector.broadcast %cst_40 : f32 to vector<8x1xf32>
    %93 = arith.addf %89, %92 : vector<8x1xf32>
    %94 = math.rsqrt %93 : vector<8x1xf32>
    %95 = vector.broadcast %94 : vector<8x1xf32> to vector<8x128xf32>
    %96 = arith.mulf %91, %95 : vector<8x128xf32>
    %97 = vector.broadcast %14 : vector<1x128xf32> to vector<8x128xf32>
    %98 = arith.mulf %96, %97 : vector<8x128xf32>
    %99 = vector.broadcast %15 : vector<1x128xf32> to vector<8x128xf32>
    %100 = arith.addf %98, %99 : vector<8x128xf32>
    %c0_41 = arith.constant 0 : index
    %c0_42 = arith.constant 0 : index
    %101 = vector.load %arg1[%c0_41, %c0_42] : memref<8x32xbf16, #tpu.memory_space<vmem>>, vector<8x32xbf16>
    %c0_43 = arith.constant 0 : index
    %c0_44 = arith.constant 0 : index
    %102 = vector.load %arg5[%c0_43, %c0_44] : memref<416x128xbf16, #tpu.memory_space<vmem>>, vector<32x128xbf16>
    %c32 = arith.constant 32 : index
    %c0_45 = arith.constant 0 : index
    %103 = vector.load %arg5[%c32, %c0_45] : memref<416x128xbf16, #tpu.memory_space<vmem>>, vector<128x128xbf16>
    %c160 = arith.constant 160 : index
    %c0_46 = arith.constant 0 : index
    %104 = vector.load %arg5[%c160, %c0_46] : memref<416x128xbf16, #tpu.memory_space<vmem>>, vector<128x128xbf16>
    %c288 = arith.constant 288 : index
    %c0_47 = arith.constant 0 : index
    %105 = vector.load %arg5[%c288, %c0_47] : memref<416x128xbf16, #tpu.memory_space<vmem>>, vector<128x128xbf16>
    %c1_48 = arith.constant 1 : index
    %c0_49 = arith.constant 0 : index
    %106 = vector.load %arg6[%c1_48, %c0_49] : memref<8x128xf32, #tpu.memory_space<vmem>>, vector<1x128xf32>
    %c2_50 = arith.constant 2 : index
    %c0_51 = arith.constant 0 : index
    %107 = vector.load %arg6[%c2_50, %c0_51] : memref<8x128xf32, #tpu.memory_space<vmem>>, vector<1x128xf32>
    %c3_52 = arith.constant 3 : index
    %c0_53 = arith.constant 0 : index
    %108 = vector.load %arg6[%c3_52, %c0_53] : memref<8x128xf32, #tpu.memory_space<vmem>>, vector<1x128xf32>
    %c4_54 = arith.constant 4 : index
    %c0_55 = arith.constant 0 : index
    %109 = vector.load %arg6[%c4_54, %c0_55] : memref<8x128xf32, #tpu.memory_space<vmem>>, vector<1x128xf32>
    %c5_56 = arith.constant 5 : index
    %c0_57 = arith.constant 0 : index
    %110 = vector.load %arg6[%c5_56, %c0_57] : memref<8x128xf32, #tpu.memory_space<vmem>>, vector<1x128xf32>
    %c6_58 = arith.constant 6 : index
    %c0_59 = arith.constant 0 : index
    %111 = vector.load %arg6[%c6_58, %c0_59] : memref<8x128xf32, #tpu.memory_space<vmem>>, vector<1x128xf32>
    %cst_60 = arith.constant dense<0.000000e+00> : vector<8x128xf32>
    %112 = tpu.matmul %101, %102, %cst_60 {dimension_numbers = #tpu.dot_dimension_numbers<[1], [0], [0], [1], [0, 0, 1, 1], [], []>} : vector<8x32xbf16>, vector<32x128xbf16>, vector<8x128xf32> -> vector<8x128xf32>
    %113 = vector.broadcast %106 : vector<1x128xf32> to vector<8x128xf32>
    %114 = arith.addf %112, %113 : vector<8x128xf32>
    %cst_61 = arith.constant 5.000000e-01 : f32
    %115 = vector.broadcast %cst_61 : f32 to vector<8x128xf32>
    %116 = arith.mulf %115, %114 : vector<8x128xf32>
    %cst_62 = arith.constant 0.707106769 : f32
    %117 = vector.broadcast %cst_62 : f32 to vector<8x128xf32>
    %118 = arith.mulf %114, %117 : vector<8x128xf32>
    %119 = math.absf %118 : vector<8x128xf32>
    %cst_63 = arith.constant 0.327591091 : f32
    %120 = vector.broadcast %cst_63 : f32 to vector<8x128xf32>
    %121 = arith.mulf %120, %119 : vector<8x128xf32>
    %cst_64 = arith.constant 1.000000e+00 : f32
    %122 = vector.broadcast %cst_64 : f32 to vector<8x128xf32>
    %123 = arith.addf %122, %121 : vector<8x128xf32>
    %124 = tpu.reciprocal %123 {approx = true} : vector<8x128xf32> -> vector<8x128xf32>
    %cst_65 = arith.constant 1.06140542 : f32
    %125 = vector.broadcast %cst_65 : f32 to vector<8x128xf32>
    %126 = arith.mulf %125, %124 : vector<8x128xf32>
    %cst_66 = arith.constant -1.45315206 : f32
    %127 = vector.broadcast %cst_66 : f32 to vector<8x128xf32>
    %128 = arith.addf %126, %127 : vector<8x128xf32>
    %129 = arith.mulf %128, %124 : vector<8x128xf32>
    %cst_67 = arith.constant 1.42141378 : f32
    %130 = vector.broadcast %cst_67 : f32 to vector<8x128xf32>
    %131 = arith.addf %129, %130 : vector<8x128xf32>
    %132 = arith.mulf %131, %124 : vector<8x128xf32>
    %cst_68 = arith.constant -0.284496725 : f32
    %133 = vector.broadcast %cst_68 : f32 to vector<8x128xf32>
    %134 = arith.addf %132, %133 : vector<8x128xf32>
    %135 = arith.mulf %134, %124 : vector<8x128xf32>
    %cst_69 = arith.constant 0.254829586 : f32
    %136 = vector.broadcast %cst_69 : f32 to vector<8x128xf32>
    %137 = arith.addf %135, %136 : vector<8x128xf32>
    %138 = arith.mulf %137, %124 : vector<8x128xf32>
    %139 = arith.mulf %119, %119 : vector<8x128xf32>
    %cst_70 = arith.constant 0.000000e+00 : f32
    %140 = vector.broadcast %cst_70 : f32 to vector<8x128xf32>
    %141 = arith.subf %140, %139 : vector<8x128xf32>
    %142 = math.exp %141 : vector<8x128xf32>
    %143 = arith.mulf %138, %142 : vector<8x128xf32>
    %cst_71 = arith.constant 1.000000e+00 : f32
    %144 = vector.broadcast %cst_71 : f32 to vector<8x128xf32>
    %145 = arith.subf %144, %143 : vector<8x128xf32>
    %cst_72 = arith.constant 0.000000e+00 : f32
    %146 = vector.broadcast %cst_72 : f32 to vector<8x128xf32>
    %147 = arith.cmpf oge, %118, %146 : vector<8x128xf32>
    %cst_73 = arith.constant 0.000000e+00 : f32
    %148 = vector.broadcast %cst_73 : f32 to vector<8x128xf32>
    %149 = arith.subf %148, %145 : vector<8x128xf32>
    %150 = arith.select %147, %145, %149 : vector<8x128xi1>, vector<8x128xf32>
    %cst_74 = arith.constant 1.000000e+00 : f32
    %151 = vector.broadcast %cst_74 : f32 to vector<8x128xf32>
    %152 = arith.addf %151, %150 : vector<8x128xf32>
    %153 = arith.mulf %116, %152 : vector<8x128xf32>
    %154 = arith.truncf %153 : vector<8x128xf32> to vector<8x128xbf16>
    %cst_75 = arith.constant dense<0.000000e+00> : vector<8x128xf32>
    %155 = tpu.matmul %154, %103, %cst_75 {dimension_numbers = #tpu.dot_dimension_numbers<[1], [0], [0], [1], [0, 0, 1, 1], [], []>} : vector<8x128xbf16>, vector<128x128xbf16>, vector<8x128xf32> -> vector<8x128xf32>
    %156 = vector.broadcast %107 : vector<1x128xf32> to vector<8x128xf32>
    %157 = arith.addf %155, %156 : vector<8x128xf32>
    %cst_76 = arith.constant 0.000000e+00 : f32
    %158 = vector.broadcast %cst_76 : f32 to vector<8x128xf32>
    %159 = arith.subf %158, %157 : vector<8x128xf32>
    %160 = math.exp %159 : vector<8x128xf32>
    %cst_77 = arith.constant 1.000000e+00 : f32
    %161 = vector.broadcast %cst_77 : f32 to vector<8x128xf32>
    %162 = arith.addf %161, %160 : vector<8x128xf32>
    %163 = tpu.reciprocal %162 {approx = true} : vector<8x128xf32> -> vector<8x128xf32>
    %164 = arith.mulf %157, %163 : vector<8x128xf32>
    %165 = arith.truncf %164 : vector<8x128xf32> to vector<8x128xbf16>
    %cst_78 = arith.constant dense<0.000000e+00> : vector<8x128xf32>
    %166 = tpu.matmul %165, %104, %cst_78 {dimension_numbers = #tpu.dot_dimension_numbers<[1], [0], [0], [1], [0, 0, 1, 1], [], []>} : vector<8x128xbf16>, vector<128x128xbf16>, vector<8x128xf32> -> vector<8x128xf32>
    %167 = vector.broadcast %108 : vector<1x128xf32> to vector<8x128xf32>
    %168 = arith.addf %166, %167 : vector<8x128xf32>
    %169 = arith.truncf %168 : vector<8x128xf32> to vector<8x128xbf16>
    %cst_79 = arith.constant dense<0.000000e+00> : vector<8x128xf32>
    %170 = tpu.matmul %169, %105, %cst_79 {dimension_numbers = #tpu.dot_dimension_numbers<[1], [0], [0], [1], [0, 0, 1, 1], [], []>} : vector<8x128xbf16>, vector<128x128xbf16>, vector<8x128xf32> -> vector<8x128xf32>
    %171 = vector.broadcast %109 : vector<1x128xf32> to vector<8x128xf32>
    %172 = arith.addf %170, %171 : vector<8x128xf32>
    %173 = arith.addf %172, %114 : vector<8x128xf32>
    %cst_80 = arith.constant dense<0.000000e+00> : vector<8xf32>
    %174 = vector.multi_reduction <add>, %173, %cst_80 [1] : vector<8x128xf32> to vector<8xf32>
    %175 = vector.shape_cast %174 : vector<8xf32> to vector<8x1xf32>
    %cst_81 = arith.constant 1.280000e+02 : f32
    %176 = vector.broadcast %cst_81 : f32 to vector<8x1xf32>
    %177 = arith.divf %175, %176 : vector<8x1xf32>
    %178 = vector.broadcast %177 : vector<8x1xf32> to vector<8x128xf32>
    %179 = arith.subf %173, %178 : vector<8x128xf32>
    %180 = arith.mulf %179, %179 : vector<8x128xf32>
    %cst_82 = arith.constant dense<0.000000e+00> : vector<8xf32>
    %181 = vector.multi_reduction <add>, %180, %cst_82 [1] : vector<8x128xf32> to vector<8xf32>
    %182 = vector.shape_cast %181 : vector<8xf32> to vector<8x1xf32>
    %cst_83 = arith.constant 1.280000e+02 : f32
    %183 = vector.broadcast %cst_83 : f32 to vector<8x1xf32>
    %184 = arith.divf %182, %183 : vector<8x1xf32>
    %185 = vector.broadcast %177 : vector<8x1xf32> to vector<8x128xf32>
    %186 = arith.subf %173, %185 : vector<8x128xf32>
    %cst_84 = arith.constant 9.99999974E-6 : f32
    %187 = vector.broadcast %cst_84 : f32 to vector<8x1xf32>
    %188 = arith.addf %184, %187 : vector<8x1xf32>
    %189 = math.rsqrt %188 : vector<8x1xf32>
    %190 = vector.broadcast %189 : vector<8x1xf32> to vector<8x128xf32>
    %191 = arith.mulf %186, %190 : vector<8x128xf32>
    %192 = vector.broadcast %110 : vector<1x128xf32> to vector<8x128xf32>
    %193 = arith.mulf %191, %192 : vector<8x128xf32>
    %194 = vector.broadcast %111 : vector<1x128xf32> to vector<8x128xf32>
    %195 = arith.addf %193, %194 : vector<8x128xf32>
    %cst_85 = arith.constant dense<0.000000e+00> : vector<8x8xf32>
    %196 = tpu.matmul %195, %100, %cst_85 {dimension_numbers = #tpu.dot_dimension_numbers<[1], [1], [0], [0], [0, 0, 1, 0], [], []>} : vector<8x128xf32>, vector<8x128xf32>, vector<8x8xf32> -> vector<8x8xf32>
    %cst_86 = arith.constant 1.000000e+00 : f32
    %197 = vector.broadcast %cst_86 : f32 to vector<8x8xf32>
    %198 = arith.mulf %196, %197 : vector<8x8xf32>
    %cst_87 = arith.constant dense<0.000000e+00> : vector<8x8xf32>
    %199 = tpu.matmul %100, %100, %cst_87 {dimension_numbers = #tpu.dot_dimension_numbers<[1], [1], [0], [0], [0, 0, 1, 0], [], []>} : vector<8x128xf32>, vector<8x128xf32>, vector<8x8xf32> -> vector<8x8xf32>
    %cst_88 = arith.constant dense<0.000000e+00> : vector<8x8xf32>
    %200 = tpu.matmul %195, %195, %cst_88 {dimension_numbers = #tpu.dot_dimension_numbers<[1], [1], [0], [0], [0, 0, 1, 0], [], []>} : vector<8x128xf32>, vector<8x128xf32>, vector<8x8xf32> -> vector<8x8xf32>
    %201 = arith.addf %199, %200 : vector<8x8xf32>
    %cst_89 = arith.constant 5.000000e-01 : f32
    %202 = vector.broadcast %cst_89 : f32 to vector<8x8xf32>
    %203 = arith.mulf %201, %202 : vector<8x8xf32>
    %cst_90 = arith.constant dense<0xFF800000> : vector<8xf32>
    %204 = vector.multi_reduction <maximumf>, %203, %cst_90 [1] : vector<8x8xf32> to vector<8xf32>
    %205 = vector.shape_cast %204 : vector<8xf32> to vector<8x1xf32>
    %206 = vector.broadcast %205 : vector<8x1xf32> to vector<8x8xf32>
    %207 = arith.subf %203, %206 : vector<8x8xf32>
    %208 = math.exp %207 : vector<8x8xf32>
    %cst_91 = arith.constant dense<0.000000e+00> : vector<8xf32>
    %209 = vector.multi_reduction <add>, %208, %cst_91 [1] : vector<8x8xf32> to vector<8xf32>
    %210 = vector.shape_cast %209 : vector<8xf32> to vector<8x1xf32>
    %211 = tpu.reciprocal %210 {approx = true} : vector<8x1xf32> -> vector<8x1xf32>
    %212 = vector.broadcast %211 : vector<8x1xf32> to vector<8x8xf32>
    %213 = arith.mulf %208, %212 : vector<8x8xf32>
    %cst_92 = arith.constant dense<0xFF800000> : vector<8xf32>
    %214 = vector.multi_reduction <maximumf>, %198, %cst_92 [1] : vector<8x8xf32> to vector<8xf32>
    %215 = vector.shape_cast %214 : vector<8xf32> to vector<8x1xf32>
    %216 = vector.broadcast %215 : vector<8x1xf32> to vector<8x8xf32>
    %217 = arith.subf %198, %216 : vector<8x8xf32>
    %218 = math.exp %217 : vector<8x8xf32>
    %cst_93 = arith.constant dense<0.000000e+00> : vector<8xf32>
    %219 = vector.multi_reduction <add>, %218, %cst_93 [1] : vector<8x8xf32> to vector<8xf32>
    %220 = vector.shape_cast %219 : vector<8xf32> to vector<8x1xf32>
    %221 = math.log %220 : vector<8x1xf32>
    %222 = vector.broadcast %221 : vector<8x1xf32> to vector<8x8xf32>
    %223 = arith.subf %217, %222 : vector<8x8xf32>
    %cst_94 = arith.constant dense<0xFF800000> : vector<8xf32>
    %224 = vector.multi_reduction <maximumf>, %198, %cst_94 [0] : vector<8x8xf32> to vector<8xf32>
    %225 = vector.shape_cast %224 : vector<8xf32> to vector<1x8xf32>
    %226 = vector.broadcast %225 : vector<1x8xf32> to vector<8x8xf32>
    %227 = arith.subf %198, %226 : vector<8x8xf32>
    %228 = math.exp %227 : vector<8x8xf32>
    %cst_95 = arith.constant dense<0.000000e+00> : vector<8xf32>
    %229 = vector.multi_reduction <add>, %228, %cst_95 [0] : vector<8x8xf32> to vector<8xf32>
    %230 = vector.shape_cast %229 : vector<8xf32> to vector<1x8xf32>
    %231 = math.log %230 : vector<1x8xf32>
    %232 = vector.broadcast %231 : vector<1x8xf32> to vector<8x8xf32>
    %233 = arith.subf %227, %232 : vector<8x8xf32>
    %cst_96 = arith.constant 0.000000e+00 : f32
    %234 = vector.broadcast %cst_96 : f32 to vector<8x8xf32>
    %235 = arith.subf %234, %213 : vector<8x8xf32>
    %236 = arith.addf %223, %233 : vector<8x8xf32>
    %237 = arith.mulf %235, %236 : vector<8x8xf32>
    %cst_97 = arith.constant dense<0.000000e+00> : vector<8xf32>
    %238 = vector.multi_reduction <add>, %237, %cst_97 [1] : vector<8x8xf32> to vector<8xf32>
    %239 = vector.shape_cast %238 : vector<8xf32> to vector<8x1xf32>
    %cst_98 = arith.constant dense<0.000000e+00> : vector<1xf32>
    %240 = vector.multi_reduction <add>, %239, %cst_98 [0] : vector<8x1xf32> to vector<1xf32>
    %241 = vector.shape_cast %240 : vector<1xf32> to vector<1x1xf32>
    %cst_99 = arith.constant 6.250000e-02 : f32
    %242 = vector.broadcast %cst_99 : f32 to vector<1x1xf32>
    %243 = arith.mulf %241, %242 : vector<1x1xf32>
    %c0_100 = arith.constant 0 : index
    %c0_101 = arith.constant 0 : index
    %244 = vector.load %arg7[%c0_100, %c0_101] : memref<1x1xf32, #tpu.memory_space<vmem>>, vector<1x1xf32>
    tpu.vector_store %arg7[%c0_100, %c0_101], %243 {strides = array<i32>} : memref<1x1xf32, #tpu.memory_space<vmem>>, vector<1x1xf32>,
    return
  }
}

</mosaic_0001>

<llo_original>
// kernel: tpu_custom_call.1
$region0: #{tpu_custom_call.1}
  #allocation0 [shape = 'u32[]', space=smem, size = 0x4, offset = 0x4, fixed_abs, tag = 'smem constant byte address 0x4 - core index']
  #allocation1 [shape = 'u32[144,128]{1,0:T(1,128)}', space=vmem, size = 0x12000, scoped, tag = 'internal scratch']
  %s0 = inlined_call_operand.hbm [shape: bf16[8,16], index: 0, kind: input, shape index: {}]
  %s1 = inlined_call_operand.hbm [shape: bf16[8,32], index: 1, kind: input, shape index: {}]
  %s2 = inlined_call_operand.hbm [shape: bf16[16,128], index: 2, kind: input, shape index: {}]
  %s3 = inlined_call_operand.hbm [shape: bf16[512,128], index: 3, kind: input, shape index: {}]
  %s4 = inlined_call_operand.hbm [shape: f32[8,128], index: 4, kind: input, shape index: {}]
  %s5 = inlined_call_operand.hbm [shape: bf16[416,128], index: 5, kind: input, shape index: {}]
  %s6 = inlined_call_operand.vmem [shape: f32[8,128], index: 6, kind: input, shape index: {}]
  %s7 = inlined_call_operand.hbm [shape: f32[1,1], index: 7, kind: output, shape index: {}]
  %s8 = sld [smem:[#allocation0]]
  $region62: #{tpu_custom_call.1} parent=0
    _
  %s10 = ssub.s32 1, %s8
  %s11 = scalar_select 0, %s10, %s8
  $region1: #{tpu_custom_call.1} parent=0
    #allocation2 [shape = 'u8[2048]{0}', space=vmem, size = 0x800, scoped, tag = 'input window, operand 0, single buffered']
    #allocation3 [shape = 's32[1]{0}', space=sflag, size = 0x4, scoped, tag = 'scoped memory for tpu_custom_call.1']
    #allocation4 [shape = 's32[1]{0}', space=sflag, size = 0x4, scoped, tag = 'scoped memory for tpu_custom_call.1']
    #allocation5 [shape = 'u8[2048]{0}', space=vmem, size = 0x800, scoped, tag = 'input window, operand 1, single buffered']
    #allocation6 [shape = 's32[1]{0}', space=sflag, size = 0x4, scoped, tag = 'scoped memory for tpu_custom_call.1']
    #allocation7 [shape = 'u8[4096]{0}', space=vmem, size = 0x1000, scoped, tag = 'input window, operand 2, single buffered']
    #allocation8 [shape = 'u8[131072]{0}', space=vmem, size = 0x20000, scoped, tag = 'input window, operand 3, single buffered']
    #allocation9 [shape = 's32[1]{0}', space=sflag, size = 0x4, scoped, tag = 'scoped memory for tpu_custom_call.1']
    #allocation10 [shape = 'u8[4096]{0}', space=vmem, size = 0x1000, scoped, tag = 'input window, operand 4, single buffered']
    #allocation11 [shape = 'u8[106496]{0}', space=vmem, size = 0x1a000, scoped, tag = 'input window, operand 5, single buffered']
    #allocation12 [shape = 's32[1]{0}', space=sflag, size = 0x4, scoped, tag = 'scoped memory for tpu_custom_call.1']
    #allocation13 [shape = 'u8[512]{0}', space=vmem, size = 0x400, scoped, tag = 'output window, operand 0, single buffered']
    %12 = vsyncpa [#allocation3], 0
    %13 = vsyncpa [#allocation6], 0
    %14 = vsyncpa [#allocation9], 0
    %15 = vsyncpa [#allocation12], 0
    %16 = vsyncpa [#allocation4], 0
    // Predicated region
    $region2: #{tpu_custom_call.1} parent=1 // pred_check
      _
    $region3: #{tpu_custom_call.1} parent=1 // pred_check_branch
      %18 = sbr.rel (0) target = $region5
    $region4: #{tpu_custom_call.1} parent=1 // pred_region
      %s20 = ssub.s32 64, 64
      %21 = vsyncadd [#allocation3], %s20
      %s23 = sshll.u32 [#allocation2], 4
      %s24 = int_to_ptr.vmem [resolvable:$true] %s23
      %26 = dma.hbm_to_vmem [thread:$0]  %s0, 64, %s24, [#allocation3]
    $region5: #{tpu_custom_call.1} parent=1 // pred_fallthru
      _
    // Predicated region
    $region6: #{tpu_custom_call.1} parent=1 // pred_check
      _
    $region7: #{tpu_custom_call.1} parent=1 // pred_check_branch
      %28 = sbr.rel (0) target = $region9
    $region8: #{tpu_custom_call.1} parent=1 // pred_region
      %s30 = ssub.s32 64, 64
      %31 = vsyncadd [#allocation6], %s30
      %s33 = sshll.u32 [#allocation5], 4
      %s34 = int_to_ptr.vmem [resolvable:$true] %s33
      %36 = dma.hbm_to_vmem [thread:$0]  %s1, 64, %s34, [#allocation6]
    $region9: #{tpu_custom_call.1} parent=1 // pred_fallthru
      _
    // Predicated region
    $region10: #{tpu_custom_call.1} parent=1 // pred_check
      _
    $region11: #{tpu_custom_call.1} parent=1 // pred_check_branch
      %38 = sbr.rel (0) target = $region13
    $region12: #{tpu_custom_call.1} parent=1 // pred_region
      %s40 = ssub.s32 128, 128
      %41 = vsyncadd [#allocation6], %s40
      %s42 = sshll.u32 [#allocation7], 4
      %s43 = int_to_ptr.vmem [resolvable:$true] %s42
      %48 = dma.hbm_to_vmem [thread:$0]  %s2, 128, %s43, [#allocation6], 64, 64, 4
    $region13: #{tpu_custom_call.1} parent=1 // pred_fallthru
      _
    // Predicated region
    $region14: #{tpu_custom_call.1} parent=1 // pred_check
      _
    $region15: #{tpu_custom_call.1} parent=1 // pred_check_branch
      %50 = sbr.rel (0) target = $region17
    $region16: #{tpu_custom_call.1} parent=1 // pred_region
      %s52 = ssub.s32 4096, 4096
      %53 = vsyncadd [#allocation9], %s52
      %s54 = sshll.u32 [#allocation8], 4
      %s55 = int_to_ptr.vmem [resolvable:$true] %s54
      %60 = dma.hbm_to_vmem [thread:$0]  %s3, 4096, %s55, [#allocation9], 64, 64, 4
    $region17: #{tpu_custom_call.1} parent=1 // pred_fallthru
      _
    // Predicated region
    $region18: #{tpu_custom_call.1} parent=1 // pred_check
      _
    $region19: #{tpu_custom_call.1} parent=1 // pred_check_branch
      %62 = sbr.rel (0) target = $region21
    $region20: #{tpu_custom_call.1} parent=1 // pred_region
      %s64 = ssub.s32 128, 128
      %65 = vsyncadd [#allocation9], %s64
      %s67 = sshll.u32 [#allocation10], 4
      %s68 = int_to_ptr.vmem [resolvable:$true] %s67
      %70 = dma.hbm_to_vmem [thread:$0]  %s4, 128, %s68, [#allocation9]
    $region21: #{tpu_custom_call.1} parent=1 // pred_fallthru
      _
    // Predicated region
    $region22: #{tpu_custom_call.1} parent=1 // pred_check
      _
    $region23: #{tpu_custom_call.1} parent=1 // pred_check_branch
      %72 = sbr.rel (0) target = $region25
    $region24: #{tpu_custom_call.1} parent=1 // pred_region
      %s74 = ssub.s32 3328, 3328
      %75 = vsyncadd [#allocation12], %s74
      %s76 = sshll.u32 [#allocation11], 4
      %s77 = int_to_ptr.vmem [resolvable:$true] %s76
      %82 = dma.hbm_to_vmem [thread:$0]  %s5, 3328, %s77, [#allocation12], 64, 64, 4
    $region25: #{tpu_custom_call.1} parent=1 // pred_fallthru
      _
    // Predicated region
    $region26: #{tpu_custom_call.1} parent=1 // pred_check
      _
    $region27: #{tpu_custom_call.1} parent=1 // pred_check_branch
      %84 = sbr.rel (0) target = $region29
    $region28: #{tpu_custom_call.1} parent=1 // pred_region
      _
    $region29: #{tpu_custom_call.1} parent=1 // pred_fallthru
      _
    // Predicated region
    $region30: #{tpu_custom_call.1} parent=1 // pred_check
      _
    $region31: #{tpu_custom_call.1} parent=1 // pred_check_branch
      %86 = sbr.rel (0) target = $region33
    $region32: #{tpu_custom_call.1} parent=1 // pred_region
      %87 = dma.done [#allocation3], 64
    $region33: #{tpu_custom_call.1} parent=1 // pred_fallthru
      _
    // Predicated region
    $region34: #{tpu_custom_call.1} parent=1 // pred_check
      _
    $region35: #{tpu_custom_call.1} parent=1 // pred_check_branch
      %89 = sbr.rel (0) target = $region37
    $region36: #{tpu_custom_call.1} parent=1 // pred_region
      %90 = dma.done [#allocation6], 64
    $region37: #{tpu_custom_call.1} parent=1 // pred_fallthru
      _
    // Predicated region
    $region38: #{tpu_custom_call.1} parent=1 // pred_check
      _
    $region39: #{tpu_custom_call.1} parent=1 // pred_check_branch
      %92 = sbr.rel (0) target = $region41
    $region40: #{tpu_custom_call.1} parent=1 // pred_region
      %93 = dma.done [#allocation6], 128
    $region41: #{tpu_custom_call.1} parent=1 // pred_fallthru
      _
    // Predicated region
    $region42: #{tpu_custom_call.1} parent=1 // pred_check
      _
    $region43: #{tpu_custom_call.1} parent=1 // pred_check_branch
      %95 = sbr.rel (0) target = $region45
    $region44: #{tpu_custom_call.1} parent=1 // pred_region
      %96 = dma.done [#allocation9], 4096
    $region45: #{tpu_custom_call.1} parent=1 // pred_fallthru
      _
    // Predicated region
    $region46: #{tpu_custom_call.1} parent=1 // pred_check
      _
    $region47: #{tpu_custom_call.1} parent=1 // pred_check_branch
      %98 = sbr.rel (0) target = $region49
    $region48: #{tpu_custom_call.1} parent=1 // pred_region
      %99 = dma.done [#allocation9], 128
    $region49: #{tpu_custom_call.1} parent=1 // pred_fallthru
      _
    // Predicated region
    $region50: #{tpu_custom_call.1} parent=1 // pred_check
      _
    $region51: #{tpu_custom_call.1} parent=1 // pred_check_branch
      %101 = sbr.rel (0) target = $region53
    $region52: #{tpu_custom_call.1} parent=1 // pred_region
      %102 = dma.done [#allocation12], 3328
    $region53: #{tpu_custom_call.1} parent=1 // pred_fallthru
      _
    %v104 = vld [vmem:[#allocation2] sm:$0xf]
    %v105 = vld [vmem:[#allocation7] sm:$0xf]
    %v106 = vld [vmem:[#allocation7 + $0x4] sm:$0xf]
    %v107 = vld [vmem:[#allocation10] sm:$0x1]
    %v108 = vlaneseq
    %v109 = vshrl.u32 %v108, 7
    %v110 = vsub.s32 0, %v109
    %v111 = vrot.slane %v107, %v110
    %v114 = vunpack.c.l.b16 %v105
    %v115 = vunpack.c.l.b16 %v106
    %v116 = vpack.c.b16 %v115, %v114
    %vm118 = vcmask 130048
    %v120 = vsel %vm118, %v104, 0
    %122 = vmatprep.subr.bf16.mxu0 0
    %123 = vmatpush1.bf16.msra.mxu0 0
    %124 = vmatprep.subr.bf16.mxu0 0
    %125 = vmatpush1.bf16.msra.mxu0 0
    %126 = vmatprep.subr.bf16.mxu0 0
    %127 = vmatpush1.bf16.msra.mxu0 0
    %128 = vmatprep.subr.bf16.mxu0 0
    %129 = vmatpush1.bf16.msra.mxu0 0
    %130 = vmatprep.subr.bf16.mxu0 0
    %131 = vmatpush1.bf16.msra.mxu0 0
    %132 = vmatprep.subr.bf16.mxu0 0
    %133 = vmatpush1.bf16.msra.mxu0 0
    %134 = vmatprep.subr.bf16.mxu0 0
    %135 = vmatpush1.bf16.msra.mxu0 0
    %136 = vmatprep.subr.bf16.mxu0 0
    %137 = vmatpush1.bf16.msra.mxu0 %v116
    %138 = vmatprep.subr.bf16.mxu0 0
    %139 = vmatpush2.bf16.msra.mxu0 0
    %140 = vmatprep.subr.bf16.mxu0 0
    %141 = vmatpush2.bf16.msra.mxu0 0
    %142 = vmatprep.subr.bf16.mxu0 0
    %143 = vmatpush2.bf16.msra.mxu0 0
    %144 = vmatprep.subr.bf16.mxu0 0
    %145 = vmatpush2.bf16.msra.mxu0 0
    %146 = vmatprep.subr.bf16.mxu0 0
    %147 = vmatpush2.bf16.msra.mxu0 0
    %148 = vmatprep.subr.bf16.mxu0 0
    %149 = vmatpush2.bf16.msra.mxu0 0
    %150 = vmatprep.subr.bf16.mxu0 0
    %151 = vmatpush2.bf16.msra.mxu0 0
    %152 = vmatprep.subr.bf16.mxu0 0
    %153 = vmatpush2.bf16.msra.mxu0 0
    %154 = vmatprep.mubr.bf16.mxu0 0
    %155 = vmatmul.mubr.bf16.gmra.mxu0 %v120
    %v156 = vpop.f32.mrf.mxu0
    %v157 = vadd.f32 %v111, %v156
    %v158 = vpop.f32.mrf.mxu0
    %v159 = vpop.f32.mrf.mxu0
    %v160 = vpop.f32.mrf.mxu0
    %161 = vdwg.mxu0
    %v162 = vld [vmem:[#allocation8] sm:$0xf]
    %v163 = vld [vmem:[#allocation8 + $0x4] sm:$0xf]
    %v164 = vld [vmem:[#allocation8 + $0x8] sm:$0xf]
    %v165 = vld [vmem:[#allocation8 + $0xc] sm:$0xf]
    %v166 = vld [vmem:[#allocation8 + $0x10] sm:$0xf]
    %v167 = vld [vmem:[#allocation8 + $0x14] sm:$0xf]
    %v168 = vld [vmem:[#allocation8 + $0x18] sm:$0xf]
    %v169 = vld [vmem:[#allocation8 + $0x1c] sm:$0xf]
    %v170 = vld [vmem:[#allocation8 + $0x20] sm:$0xf]
    %v171 = vld [vmem:[#allocation8 + $0x24] sm:$0xf]
    %v172 = vld [vmem:[#allocation8 + $0x28] sm:$0xf]
    %v173 = vld [vmem:[#allocation8 + $0x2c] sm:$0xf]
    %v174 = vld [vmem:[#allocation8 + $0x30] sm:$0xf]
    %v175 = vld [vmem:[#allocation8 + $0x34] sm:$0xf]
    %v176 = vld [vmem:[#allocation8 + $0x38] sm:$0xf]
    %v177 = vld [vmem:[#allocation8 + $0x3c] sm:$0xf]
    %v178 = vld [vmem:[#allocation8 + $0x40] sm:$0xf]
    %v179 = vld [vmem:[#allocation8 + $0x44] sm:$0xf]
    %v180 = vld [vmem:[#allocation8 + $0x48] sm:$0xf]
    %v181 = vld [vmem:[#allocation8 + $0x4c] sm:$0xf]
    %v182 = vld [vmem:[#allocation8 + $0x50] sm:$0xf]
    %v183 = vld [vmem:[#allocation8 + $0x54] sm:$0xf]
    %v184 = vld [vmem:[#allocation8 + $0x58] sm:$0xf]
    %v185 = vld [vmem:[#allocation8 + $0x5c] sm:$0xf]
    %v186 = vld [vmem:[#allocation8 + $0x60] sm:$0xf]
    %v187 = vld [vmem:[#allocation8 + $0x64] sm:$0xf]
    %v188 = vld [vmem:[#allocation8 + $0x68] sm:$0xf]
    %v189 = vld [vmem:[#allocation8 + $0x6c] sm:$0xf]
    %v190 = vld [vmem:[#allocation8 + $0x70] sm:$0xf]
    %v191 = vld [vmem:[#allocation8 + $0x74] sm:$0xf]
    %v192 = vld [vmem:[#allocation8 + $0x78] sm:$0xf]
    %v193 = vld [vmem:[#allocation8 + $0x7c] sm:$0xf]
    %v194 = vld [vmem:[#allocation8 + $0x80] sm:$0xf]
    %v195 = vld [vmem:[#allocation8 + $0x84] sm:$0xf]
    %v196 = vld [vmem:[#allocation8 + $0x88] sm:$0xf]
    %v197 = vld [vmem:[#allocation8 + $0x8c] sm:$0xf]
    %v198 = vld [vmem:[#allocation8 + $0x90] sm:$0xf]
    %v199 = vld [vmem:[#allocation8 + $0x94] sm:$0xf]
    %v200 = vld [vmem:[#allocation8 + $0x98] sm:$0xf]
    %v201 = vld [vmem:[#allocation8 + $0x9c] sm:$0xf]
    %v202 = vld [vmem:[#allocation8 + $0xa0] sm:$0xf]
    %v203 = vld [vmem:[#allocation8 + $0xa4] sm:$0xf]
    %v204 = vld [vmem:[#allocation8 + $0xa8] sm:$0xf]
    %v205 = vld [vmem:[#allocation8 + $0xac] sm:$0xf]
    %v206 = vld [vmem:[#allocation8 + $0xb0] sm:$0xf]
    %v207 = vld [vmem:[#allocation8 + $0xb4] sm:$0xf]
    %v208 = vld [vmem:[#allocation8 + $0xb8] sm:$0xf]
    %v209 = vld [vmem:[#allocation8 + $0xbc] sm:$0xf]
    %v210 = vld [vmem:[#allocation8 + $0xc0] sm:$0xf]
    %v211 = vld [vmem:[#allocation8 + $0xc4] sm:$0xf]
    %v212 = vld [vmem:[#allocation8 + $0xc8] sm:$0xf]
    %v213 = vld [vmem:[#allocation8 + $0xcc] sm:$0xf]
    %v214 = vld [vmem:[#allocation8 + $0xd0] sm:$0xf]
    %v215 = vld [vmem:[#allocation8 + $0xd4] sm:$0xf]
    %v216 = vld [vmem:[#allocation8 + $0xd8] sm:$0xf]
    %v217 = vld [vmem:[#allocation8 + $0xdc] sm:$0xf]
    %v218 = vld [vmem:[#allocation8 + $0xe0] sm:$0xf]
    %v219 = vld [vmem:[#allocation8 + $0xe4] sm:$0xf]
    %v220 = vld [vmem:[#allocation8 + $0xe8] sm:$0xf]
    %v221 = vld [vmem:[#allocation8 + $0xec] sm:$0xf]
    %v222 = vld [vmem:[#allocation8 + $0xf0] sm:$0xf]
    %v223 = vld [vmem:[#allocation8 + $0xf4] sm:$0xf]
    %v224 = vld [vmem:[#allocation8 + $0xf8] sm:$0xf]
    %v225 = vld [vmem:[#allocation8 + $0xfc] sm:$0xf]
    %v226 = vld [vmem:[#allocation10 + $0x1] sm:$0x1]
    %v227 = vld [vmem:[#allocation10 + $0x2] sm:$0x1]
    %v228 = vld [vmem:[#allocation10 + $0x3] sm:$0x1]
    %v229 = vld [vmem:[#allocation10 + $0x4] sm:$0x1]
    %v230 = vld [vmem:[#allocation10 + $0x5] sm:$0x1]
    %v231 = vld [vmem:[#allocation10 + $0x6] sm:$0x1]
    %v232 = vpack.c.bf16 %v157, %v157
    %v233 = vlaneseq
    %v234 = vshrl.u32 %v233, 7
    %v235 = vsub.s32 0, %v234
    %v236 = vrot.slane %v226, %v235
    %v253 = vunpack.c.l.b16 %v162
    %v254 = vunpack.c.l.b16 %v163
    %v255 = vunpack.c.l.b16 %v164
    %v256 = vunpack.c.l.b16 %v165
    %v257 = vunpack.c.l.b16 %v166
    %v258 = vunpack.c.l.b16 %v167
    %v259 = vunpack.c.l.b16 %v168
    %v260 = vunpack.c.l.b16 %v169
    %v261 = vunpack.c.l.b16 %v170
    %v262 = vunpack.c.l.b16 %v171
    %v263 = vunpack.c.l.b16 %v172
    %v264 = vunpack.c.l.b16 %v173
    %v265 = vunpack.c.l.b16 %v174
    %v266 = vunpack.c.l.b16 %v175
    %v267 = vunpack.c.l.b16 %v176
    %v268 = vunpack.c.l.b16 %v177
    %v269 = vpack.c.b16 %v254, %v253
    %v270 = vpack.c.b16 %v256, %v255
    %v271 = vpack.c.b16 %v258, %v257
    %v272 = vpack.c.b16 %v260, %v259
    %v273 = vpack.c.b16 %v262, %v261
    %v274 = vpack.c.b16 %v264, %v263
    %v275 = vpack.c.b16 %v266, %v265
    %v276 = vpack.c.b16 %v268, %v267
    %285 = vmatprep.subr.bf16.mxu0 0
    %286 = vmatpush1.bf16.msra.mxu0 %v276
    %287 = vmatprep.subr.bf16.mxu0 0
    %288 = vmatpush1.bf16.msra.mxu0 %v275
    %289 = vmatprep.subr.bf16.mxu0 0
    %290 = vmatpush1.bf16.msra.mxu0 %v274
    %291 = vmatprep.subr.bf16.mxu0 0
    %292 = vmatpush1.bf16.msra.mxu0 %v273
    %293 = vmatprep.subr.bf16.mxu0 0
    %294 = vmatpush1.bf16.msra.mxu0 %v272
    %295 = vmatprep.subr.bf16.mxu0 0
    %296 = vmatpush1.bf16.msra.mxu0 %v271
    %297 = vmatprep.subr.bf16.mxu0 0
    %298 = vmatpush1.bf16.msra.mxu0 %v270
    %299 = vmatprep.subr.bf16.mxu0 0
    %300 = vmatpush1.bf16.msra.mxu0 %v269
    %301 = vmatprep.subr.bf16.mxu0 0
    %302 = vmatpush2.bf16.msra.mxu0 0
    %303 = vmatprep.subr.bf16.mxu0 0
    %304 = vmatpush2.bf16.msra.mxu0 0
    %305 = vmatprep.subr.bf16.mxu0 0
    %306 = vmatpush2.bf16.msra.mxu0 0
    %307 = vmatprep.subr.bf16.mxu0 0
    %308 = vmatpush2.bf16.msra.mxu0 0
    %309 = vmatprep.subr.bf16.mxu0 0
    %310 = vmatpush2.bf16.msra.mxu0 0
    %311 = vmatprep.subr.bf16.mxu0 0
    %312 = vmatpush2.bf16.msra.mxu0 0
    %313 = vmatprep.subr.bf16.mxu0 0
    %314 = vmatpush2.bf16.msra.mxu0 0
    %315 = vmatprep.subr.bf16.mxu0 0
    %316 = vmatpush2.bf16.msra.mxu0 0
    %317 = vmatprep.mubr.bf16.mxu0 0
    %318 = vmatmul.mubr.bf16.gmra.mxu0 %v232
    %v319 = vpop.f32.mrf.mxu0
    %v320 = vadd.f32 %v236, %v319
    %v321 = vpop.f32.mrf.mxu0
    %v322 = vpop.f32.mrf.mxu0
    %v323 = vpop.f32.mrf.mxu0
    %324 = vdwg.mxu0
    %v325 = vmul.f32 %v320, 0.5
    %v326 = vmul.f32 %v320, 0.70710677
    %v327 = vand.u32 2147483647, %v326
    %v328 = vmul.f32 %v327, 0.3275911
    %v329 = vadd.f32 %v328, 1.0
    %v330 = vrcp.pop %v329
    %v331 = vmul.f32 %v330, 1.0614054
    %v332 = vadd.f32 %v331, -1.4531521
    %v333 = vmul.f32 %v332, %v330
    %v334 = vadd.f32 %v333, 1.4214138
    %v335 = vmul.f32 %v334, %v330
    %v336 = vadd.f32 %v335, -0.28449672
    %v337 = vmul.f32 %v336, %v330
    %v338 = vadd.f32 %v337, 0.2548296
    %v339 = vmul.f32 %v338, %v330
    %v340 = vmul.f32 %v327, %v327
    %v341 = vsub.f32 0.0, %v340
    %v342 = vmul.f32 %v341, 1.442695
    %v343 = vpow.pop %v342
    %v344 = vmul.f32 %v339, %v343
    %v345 = vsub.f32 1.0, %v344
    %vm346 = vcmp.ge.f32.partialorder %v326, 0.0
    %v347 = vsub.f32 0.0, %v345
    %v348 = vsel %vm346, %v345, %v347
    %v349 = vadd.f32 %v348, 1.0
    %v350 = vmul.f32 %v325, %v349
    %v351 = vpack.c.bf16 %v350, %v350
    %v352 = vlaneseq
    %v353 = vshrl.u32 %v352, 7
    %v354 = vsub.s32 0, %v353
    %v355 = vrot.slane %v227, %v354
    %v372 = vunpack.c.l.b16 %v178
    %v373 = vunpack.c.l.b16 %v179
    %v374 = vunpack.c.l.b16 %v180
    %v375 = vunpack.c.l.b16 %v181
    %v376 = vunpack.c.l.b16 %v182
    %v377 = vunpack.c.l.b16 %v183
    %v378 = vunpack.c.l.b16 %v184
    %v379 = vunpack.c.l.b16 %v185
    %v380 = vunpack.c.l.b16 %v186
    %v381 = vunpack.c.l.b16 %v187
    %v382 = vunpack.c.l.b16 %v188
    %v383 = vunpack.c.l.b16 %v189
    %v384 = vunpack.c.l.b16 %v190
    %v385 = vunpack.c.l.b16 %v191
    %v386 = vunpack.c.l.b16 %v192
    %v387 = vunpack.c.l.b16 %v193
    %v388 = vpack.c.b16 %v373, %v372
    %v389 = vpack.c.b16 %v375, %v374
    %v390 = vpack.c.b16 %v377, %v376
    %v391 = vpack.c.b16 %v379, %v378
    %v392 = vpack.c.b16 %v381, %v380
    %v393 = vpack.c.b16 %v383, %v382
    %v394 = vpack.c.b16 %v385, %v384
    %v395 = vpack.c.b16 %v387, %v386
    %404 = vmatprep.subr.bf16.mxu0 0
    %405 = vmatpush1.bf16.msra.mxu0 %v395
    %406 = vmatprep.subr.bf16.mxu0 0
    %407 = vmatpush1.bf16.msra.mxu0 %v394
    %408 = vmatprep.subr.bf16.mxu0 0
    %409 = vmatpush1.bf16.msra.mxu0 %v393
    %410 = vmatprep.subr.bf16.mxu0 0
    %411 = vmatpush1.bf16.msra.mxu0 %v392
    %412 = vmatprep.subr.bf16.mxu0 0
    %413 = vmatpush1.bf16.msra.mxu0 %v391
    %414 = vmatprep.subr.bf16.mxu0 0
    %415 = vmatpush1.bf16.msra.mxu0 %v390
    %416 = vmatprep.subr.bf16.mxu0 0
    %417 = vmatpush1.bf16.msra.mxu0 %v389
    %418 = vmatprep.subr.bf16.mxu0 0
    %419 = vmatpush1.bf16.msra.mxu0 %v388
    %420 = vmatprep.subr.bf16.mxu0 0
    %421 = vmatpush2.bf16.msra.mxu0 0
    %422 = vmatprep.subr.bf16.mxu0 0
    %423 = vmatpush2.bf16.msra.mxu0 0
    %424 = vmatprep.subr.bf16.mxu0 0
    %425 = vmatpush2.bf16.msra.mxu0 0
    %426 = vmatprep.subr.bf16.mxu0 0
    %427 = vmatpush2.bf16.msra.mxu0 0
    %428 = vmatprep.subr.bf16.mxu0 0
    %429 = vmatpush2.bf16.msra.mxu0 0
    %430 = vmatprep.subr.bf16.mxu0 0
    %431 = vmatpush2.bf16.msra.mxu0 0
    %432 = vmatprep.subr.bf16.mxu0 0
    %433 = vmatpush2.bf16.msra.mxu0 0
    %434 = vmatprep.subr.bf16.mxu0 0
    %435 = vmatpush2.bf16.msra.mxu0 0
    %436 = vmatprep.mubr.bf16.mxu0 0
    %437 = vmatmul.mubr.bf16.gmra.mxu0 %v351
    %v438 = vpop.f32.mrf.mxu0
    %v439 = vadd.f32 %v355, %v438
    %v440 = vpop.f32.mrf.mxu0
    %v441 = vpop.f32.mrf.mxu0
    %v442 = vpop.f32.mrf.mxu0
    %443 = vdwg.mxu0
    %v444 = vsub.f32 0.0, %v439
    %v445 = vmul.f32 %v444, 1.442695
    %v446 = vpow.pop %v445
    %v447 = vadd.f32 %v446, 1.0
    %v448 = vrcp.pop %v447
    %v449 = vmul.f32 %v439, %v448
    %v450 = vpack.c.bf16 %v449, %v449
    %v451 = vlaneseq
    %v452 = vshrl.u32 %v451, 7
    %v453 = vsub.s32 0, %v452
    %v454 = vrot.slane %v228, %v453
    %v471 = vunpack.c.l.b16 %v194
    %v472 = vunpack.c.l.b16 %v195
    %v473 = vunpack.c.l.b16 %v196
    %v474 = vunpack.c.l.b16 %v197
    %v475 = vunpack.c.l.b16 %v198
    %v476 = vunpack.c.l.b16 %v199
    %v477 = vunpack.c.l.b16 %v200
    %v478 = vunpack.c.l.b16 %v201
    %v479 = vunpack.c.l.b16 %v202
    %v480 = vunpack.c.l.b16 %v203
    %v481 = vunpack.c.l.b16 %v204
    %v482 = vunpack.c.l.b16 %v205
    %v483 = vunpack.c.l.b16 %v206
    %v484 = vunpack.c.l.b16 %v207
    %v485 = vunpack.c.l.b16 %v208
    %v486 = vunpack.c.l.b16 %v209
    %v487 = vpack.c.b16 %v472, %v471
    %v488 = vpack.c.b16 %v474, %v473
    %v489 = vpack.c.b16 %v476, %v475
    %v490 = vpack.c.b16 %v478, %v477
    %v491 = vpack.c.b16 %v480, %v479
    %v492 = vpack.c.b16 %v482, %v481
    %v493 = vpack.c.b16 %v484, %v483
    %v494 = vpack.c.b16 %v486, %v485
    %503 = vmatprep.subr.bf16.mxu0 0
    %504 = vmatpush1.bf16.msra.mxu0 %v494
    %505 = vmatprep.subr.bf16.mxu0 0
    %506 = vmatpush1.bf16.msra.mxu0 %v493
    %507 = vmatprep.subr.bf16.mxu0 0
    %508 = vmatpush1.bf16.msra.mxu0 %v492
    %509 = vmatprep.subr.bf16.mxu0 0
    %510 = vmatpush1.bf16.msra.mxu0 %v491
    %511 = vmatprep.subr.bf16.mxu0 0
    %512 = vmatpush1.bf16.msra.mxu0 %v490
    %513 = vmatprep.subr.bf16.mxu0 0
    %514 = vmatpush1.bf16.msra.mxu0 %v489
    %515 = vmatprep.subr.bf16.mxu0 0
    %516 = vmatpush1.bf16.msra.mxu0 %v488
    %517 = vmatprep.subr.bf16.mxu0 0
    %518 = vmatpush1.bf16.msra.mxu0 %v487
    %519 = vmatprep.subr.bf16.mxu0 0
    %520 = vmatpush2.bf16.msra.mxu0 0
    %521 = vmatprep.subr.bf16.mxu0 0
    %522 = vmatpush2.bf16.msra.mxu0 0
    %523 = vmatprep.subr.bf16.mxu0 0
    %524 = vmatpush2.bf16.msra.mxu0 0
    %525 = vmatprep.subr.bf16.mxu0 0
    %526 = vmatpush2.bf16.msra.mxu0 0
    %527 = vmatprep.subr.bf16.mxu0 0
    %528 = vmatpush2.bf16.msra.mxu0 0
    %529 = vmatprep.subr.bf16.mxu0 0
    %530 = vmatpush2.bf16.msra.mxu0 0
    %531 = vmatprep.subr.bf16.mxu0 0
    %532 = vmatpush2.bf16.msra.mxu0 0
    %533 = vmatprep.subr.bf16.mxu0 0
    %534 = vmatpush2.bf16.msra.mxu0 0
    %535 = vmatprep.mubr.bf16.mxu0 0
    %536 = vmatmul.mubr.bf16.gmra.mxu0 %v450
    %v537 = vpop.f32.mrf.mxu0
    %v538 = vadd.f32 %v454, %v537
    %v539 = vpop.f32.mrf.mxu0
    %v540 = vpop.f32.mrf.mxu0
    %v541 = vpop.f32.mrf.mxu0
    %542 = vdwg.mxu0
    %v543 = vpack.c.bf16 %v538, %v538
    %v544 = vlaneseq
    %v545 = vshrl.u32 %v544, 7
    %v546 = vsub.s32 0, %v545
    %v547 = vrot.slane %v229, %v546
    %v564 = vunpack.c.l.b16 %v210
    %v565 = vunpack.c.l.b16 %v211
    %v566 = vunpack.c.l.b16 %v212
    %v567 = vunpack.c.l.b16 %v213
    %v568 = vunpack.c.l.b16 %v214
    %v569 = vunpack.c.l.b16 %v215
    %v570 = vunpack.c.l.b16 %v216
    %v571 = vunpack.c.l.b16 %v217
    %v572 = vunpack.c.l.b16 %v218
    %v573 = vunpack.c.l.b16 %v219
    %v574 = vunpack.c.l.b16 %v220
    %v575 = vunpack.c.l.b16 %v221
    %v576 = vunpack.c.l.b16 %v222
    %v577 = vunpack.c.l.b16 %v223
    %v578 = vunpack.c.l.b16 %v224
    %v579 = vunpack.c.l.b16 %v225
    %v580 = vpack.c.b16 %v565, %v564
    %v581 = vpack.c.b16 %v567, %v566
    %v582 = vpack.c.b16 %v569, %v568
    %v583 = vpack.c.b16 %v571, %v570
    %v584 = vpack.c.b16 %v573, %v572
    %v585 = vpack.c.b16 %v575, %v574
    %v586 = vpack.c.b16 %v577, %v576
    %v587 = vpack.c.b16 %v579, %v578
    %596 = vmatprep.subr.bf16.mxu0 0
    %597 = vmatpush1.bf16.msra.mxu0 %v587
    %598 = vmatprep.subr.bf16.mxu0 0
    %599 = vmatpush1.bf16.msra.mxu0 %v586
    %600 = vmatprep.subr.bf16.mxu0 0
    %601 = vmatpush1.bf16.msra.mxu0 %v585
    %602 = vmatprep.subr.bf16.mxu0 0
    %603 = vmatpush1.bf16.msra.mxu0 %v584
    %604 = vmatprep.subr.bf16.mxu0 0
    %605 = vmatpush1.bf16.msra.mxu0 %v583
    %606 = vmatprep.subr.bf16.mxu0 0
    %607 = vmatpush1.bf16.msra.mxu0 %v582
    %608 = vmatprep.subr.bf16.mxu0 0
    %609 = vmatpush1.bf16.msra.mxu0 %v581
    %610 = vmatprep.subr.bf16.mxu0 0
    %611 = vmatpush1.bf16.msra.mxu0 %v580
    %612 = vmatprep.subr.bf16.mxu0 0
    %613 = vmatpush2.bf16.msra.mxu0 0
    %614 = vmatprep.subr.bf16.mxu0 0
    %615 = vmatpush2.bf16.msra.mxu0 0
    %616 = vmatprep.subr.bf16.mxu0 0
    %617 = vmatpush2.bf16.msra.mxu0 0
    %618 = vmatprep.subr.bf16.mxu0 0
    %619 = vmatpush2.bf16.msra.mxu0 0
    %620 = vmatprep.subr.bf16.mxu0 0
    %621 = vmatpush2.bf16.msra.mxu0 0
    %622 = vmatprep.subr.bf16.mxu0 0
    %623 = vmatpush2.bf16.msra.mxu0 0
    %624 = vmatprep.subr.bf16.mxu0 0
    %625 = vmatpush2.bf16.msra.mxu0 0
    %626 = vmatprep.subr.bf16.mxu0 0
    %627 = vmatpush2.bf16.msra.mxu0 0
    %628 = vmatprep.mubr.bf16.mxu0 0
    %629 = vmatmul.mubr.bf16.gmra.mxu0 %v543
    %v630 = vpop.f32.mrf.mxu0
    %v631 = vadd.f32 %v547, %v630
    %v632 = vpop.f32.mrf.mxu0
    %v633 = vpop.f32.mrf.mxu0
    %v634 = vpop.f32.mrf.mxu0
    %635 = vdwg.mxu0
    %v636 = vadd.f32 %v631, %v320
    %637 = vadd.xlane.f32.xlu0 %v636
    %v638 = vpop.xlane.xlu0 %637
    %v639 = vrcp.pop 128.0
    %v640 = vmul.f32 %v638, %v639
    %v641 = vsub.f32 %v636, %v640
    %v642 = vmul.f32 %v641, %v641
    %643 = vadd.xlane.f32.xlu0 %v642
    %v644 = vpop.xlane.xlu0 %643
    %v645 = vmul.f32 %v644, %v639
    %v646 = vadd.f32 %v645, 1e-05
    %v647 = vrsqrt.pop %v646
    %v648 = vmul.f32 %v641, %v647
    %v649 = vlaneseq
    %v650 = vshrl.u32 %v649, 7
    %v651 = vsub.s32 0, %v650
    %v652 = vrot.slane %v230, %v651
    %v653 = vmul.f32 %v648, %v652
    %v654 = vlaneseq
    %v655 = vshrl.u32 %v654, 7
    %v656 = vsub.s32 0, %v655
    %v657 = vrot.slane %v231, %v656
    %v658 = vadd.f32 %v653, %v657
    %v659 = vld [vmem:[#allocation5] sm:$0xf]
    %v660 = vld [vmem:[#allocation11] sm:$0xf]
    %v661 = vld [vmem:[#allocation11 + $0x4] sm:$0xf]
    %v662 = vld [vmem:[#allocation11 + $0x8] sm:$0xf]
    %v663 = vld [vmem:[#allocation11 + $0xc] sm:$0xf]
    %v664 = vld [vmem:[#allocation11 + $0x10] sm:$0xf]
    %v665 = vld [vmem:[#allocation11 + $0x14] sm:$0xf]
    %v666 = vld [vmem:[#allocation11 + $0x18] sm:$0xf]
    %v667 = vld [vmem:[#allocation11 + $0x1c] sm:$0xf]
    %v668 = vld [vmem:[#allocation11 + $0x20] sm:$0xf]
    %v669 = vld [vmem:[#allocation11 + $0x24] sm:$0xf]
    %v670 = vld [vmem:[#allocation11 + $0x28] sm:$0xf]
    %v671 = vld [vmem:[#allocation11 + $0x2c] sm:$0xf]
    %v672 = vld [vmem:[#allocation11 + $0x30] sm:$0xf]
    %v673 = vld [vmem:[#allocation11 + $0x34] sm:$0xf]
    %v674 = vld [vmem:[#allocation11 + $0x38] sm:$0xf]
    %v675 = vld [vmem:[#allocation11 + $0x3c] sm:$0xf]
    %v676 = vld [vmem:[#allocation11 + $0x40] sm:$0xf]
    %v677 = vld [vmem:[#allocation11 + $0x44] sm:$0xf]
    %v678 = vld [vmem:[#allocation11 + $0x48] sm:$0xf]
    %v679 = vld [vmem:[#allocation11 + $0x4c] sm:$0xf]
    %v680 = vld [vmem:[#allocation11 + $0x50] sm:$0xf]
    %v681 = vld [vmem:[#allocation11 + $0x54] sm:$0xf]
    %v682 = vld [vmem:[#allocation11 + $0x58] sm:$0xf]
    %v683 = vld [vmem:[#allocation11 + $0x5c] sm:$0xf]
    %v684 = vld [vmem:[#allocation11 + $0x60] sm:$0xf]
    %v685 = vld [vmem:[#allocation11 + $0x64] sm:$0xf]
    %v686 = vld [vmem:[#allocation11 + $0x68] sm:$0xf]
    %v687 = vld [vmem:[#allocation11 + $0x6c] sm:$0xf]
    %v688 = vld [vmem:[#allocation11 + $0x70] sm:$0xf]
    %v689 = vld [vmem:[#allocation11 + $0x74] sm:$0xf]
    %v690 = vld [vmem:[#allocation11 + $0x78] sm:$0xf]
    %v691 = vld [vmem:[#allocation11 + $0x7c] sm:$0xf]
    %v692 = vld [vmem:[#allocation11 + $0x80] sm:$0xf]
    %v693 = vld [vmem:[#allocation11 + $0x84] sm:$0xf]
    %v694 = vld [vmem:[#allocation11 + $0x88] sm:$0xf]
    %v695 = vld [vmem:[#allocation11 + $0x8c] sm:$0xf]
    %v696 = vld [vmem:[#allocation11 + $0x90] sm:$0xf]
    %v697 = vld [vmem:[#allocation11 + $0x94] sm:$0xf]
    %v698 = vld [vmem:[#allocation11 + $0x98] sm:$0xf]
    %v699 = vld [vmem:[#allocation11 + $0x9c] sm:$0xf]
    %v700 = vld [vmem:[#allocation11 + $0xa0] sm:$0xf]
    %v701 = vld [vmem:[#allocation11 + $0xa4] sm:$0xf]
    %v702 = vld [vmem:[#allocation11 + $0xa8] sm:$0xf]
    %v703 = vld [vmem:[#allocation11 + $0xac] sm:$0xf]
    %v704 = vld [vmem:[#allocation11 + $0xb0] sm:$0xf]
    %v705 = vld [vmem:[#allocation11 + $0xb4] sm:$0xf]
    %v706 = vld [vmem:[#allocation11 + $0xb8] sm:$0xf]
    %v707 = vld [vmem:[#allocation11 + $0xbc] sm:$0xf]
    %v708 = vld [vmem:[#allocation11 + $0xc0] sm:$0xf]
    %v709 = vld [vmem:[#allocation11 + $0xc4] sm:$0xf]
    %v710 = vld [vmem:[#allocation11 + $0xc8] sm:$0xf]
    %v711 = vld [vmem:[#allocation11 + $0xcc] sm:$0xf]
    %v712 = vld [vmem:[%s6 + $0x1] sm:$0x1]
    %v713 = vld [vmem:[%s6 + $0x2] sm:$0x1]
    %v714 = vld [vmem:[%s6 + $0x3] sm:$0x1]
    %v715 = vld [vmem:[%s6 + $0x4] sm:$0x1]
    %v716 = vld [vmem:[%s6 + $0x5] sm:$0x1]
    %v717 = vld [vmem:[%s6 + $0x6] sm:$0x1]
    %v718 = vlaneseq
    %v719 = vshrl.u32 %v718, 7
    %v720 = vsub.s32 0, %v719
    %v721 = vrot.slane %v712, %v720
    %v726 = vunpack.c.l.b16 %v660
    %v727 = vunpack.c.l.b16 %v661
    %v728 = vunpack.c.l.b16 %v662
    %v729 = vunpack.c.l.b16 %v663
    %v730 = vpack.c.b16 %v727, %v726
    %v731 = vpack.c.b16 %v729, %v728
    %vm734 = vcmask 261120
    %v736 = vsel %vm734, %v659, 0
    %738 = vmatprep.subr.bf16.mxu0 0
    %739 = vmatpush1.bf16.msra.mxu0 0
    %740 = vmatprep.subr.bf16.mxu0 0
    %741 = vmatpush1.bf16.msra.mxu0 0
    %742 = vmatprep.subr.bf16.mxu0 0
    %743 = vmatpush1.bf16.msra.mxu0 0
    %744 = vmatprep.subr.bf16.mxu0 0
    %745 = vmatpush1.bf16.msra.mxu0 0
    %746 = vmatprep.subr.bf16.mxu0 0
    %747 = vmatpush1.bf16.msra.mxu0 0
    %748 = vmatprep.subr.bf16.mxu0 0
    %749 = vmatpush1.bf16.msra.mxu0 0
    %750 = vmatprep.subr.bf16.mxu0 0
    %751 = vmatpush1.bf16.msra.mxu0 %v731
    %752 = vmatprep.subr.bf16.mxu0 0
    %753 = vmatpush1.bf16.msra.mxu0 %v730
    %754 = vmatprep.subr.bf16.mxu0 0
    %755 = vmatpush2.bf16.msra.mxu0 0
    %756 = vmatprep.subr.bf16.mxu0 0
    %757 = vmatpush2.bf16.msra.mxu0 0
    %758 = vmatprep.subr.bf16.mxu0 0
    %759 = vmatpush2.bf16.msra.mxu0 0
    %760 = vmatprep.subr.bf16.mxu0 0
    %761 = vmatpush2.bf16.msra.mxu0 0
    %762 = vmatprep.subr.bf16.mxu0 0
    %763 = vmatpush2.bf16.msra.mxu0 0
    %764 = vmatprep.subr.bf16.mxu0 0
    %765 = vmatpush2.bf16.msra.mxu0 0
    %766 = vmatprep.subr.bf16.mxu0 0
    %767 = vmatpush2.bf16.msra.mxu0 0
    %768 = vmatprep.subr.bf16.mxu0 0
    %769 = vmatpush2.bf16.msra.mxu0 0
    %770 = vmatprep.mubr.bf16.mxu0 0
    %771 = vmatmul.mubr.bf16.gmra.mxu0 %v736
    %v772 = vpop.f32.mrf.mxu0
    %v773 = vadd.f32 %v721, %v772
    %v774 = vpop.f32.mrf.mxu0
    %v775 = vpop.f32.mrf.mxu0
    %v776 = vpop.f32.mrf.mxu0
    %777 = vdwg.mxu0
    %v778 = vmul.f32 %v773, 0.5
    %v779 = vmul.f32 %v773, 0.70710677
    %v780 = vand.u32 2147483647, %v779
    %v781 = vmul.f32 %v780, 0.3275911
    %v782 = vadd.f32 %v781, 1.0
    %v783 = vrcp.pop %v782
    %v784 = vmul.f32 %v783, 1.0614054
    %v785 = vadd.f32 %v784, -1.4531521
    %v786 = vmul.f32 %v785, %v783
    %v787 = vadd.f32 %v786, 1.4214138
    %v788 = vmul.f32 %v787, %v783
    %v789 = vadd.f32 %v788, -0.28449672
    %v790 = vmul.f32 %v789, %v783
    %v791 = vadd.f32 %v790, 0.2548296
    %v792 = vmul.f32 %v791, %v783
    %v793 = vmul.f32 %v780, %v780
    %v794 = vsub.f32 0.0, %v793
    %v795 = vmul.f32 %v794, 1.442695
    %v796 = vpow.pop %v795
    %v797 = vmul.f32 %v792, %v796
    %v798 = vsub.f32 1.0, %v797
    %vm799 = vcmp.ge.f32.partialorder %v779, 0.0
    %v800 = vsub.f32 0.0, %v798
    %v801 = vsel %vm799, %v798, %v800
    %v802 = vadd.f32 %v801, 1.0
    %v803 = vmul.f32 %v778, %v802
    %v804 = vpack.c.bf16 %v803, %v803
    %v805 = vlaneseq
    %v806 = vshrl.u32 %v805, 7
    %v807 = vsub.s32 0, %v806
    %v808 = vrot.slane %v713, %v807
    %v825 = vunpack.c.l.b16 %v664
    %v826 = vunpack.c.l.b16 %v665
    %v827 = vunpack.c.l.b16 %v666
    %v828 = vunpack.c.l.b16 %v667
    %v829 = vunpack.c.l.b16 %v668
    %v830 = vunpack.c.l.b16 %v669
    %v831 = vunpack.c.l.b16 %v670
    %v832 = vunpack.c.l.b16 %v671
    %v833 = vunpack.c.l.b16 %v672
    %v834 = vunpack.c.l.b16 %v673
    %v835 = vunpack.c.l.b16 %v674
    %v836 = vunpack.c.l.b16 %v675
    %v837 = vunpack.c.l.b16 %v676
    %v838 = vunpack.c.l.b16 %v677
    %v839 = vunpack.c.l.b16 %v678
    %v840 = vunpack.c.l.b16 %v679
    %v841 = vpack.c.b16 %v826, %v825
    %v842 = vpack.c.b16 %v828, %v827
    %v843 = vpack.c.b16 %v830, %v829
    %v844 = vpack.c.b16 %v832, %v831
    %v845 = vpack.c.b16 %v834, %v833
    %v846 = vpack.c.b16 %v836, %v835
    %v847 = vpack.c.b16 %v838, %v837
    %v848 = vpack.c.b16 %v840, %v839
    %857 = vmatprep.subr.bf16.mxu0 0
    %858 = vmatpush1.bf16.msra.mxu0 %v848
    %859 = vmatprep.subr.bf16.mxu0 0
    %860 = vmatpush1.bf16.msra.mxu0 %v847
    %861 = vmatprep.subr.bf16.mxu0 0
    %862 = vmatpush1.bf16.msra.mxu0 %v846
    %863 = vmatprep.subr.bf16.mxu0 0
    %864 = vmatpush1.bf16.msra.mxu0 %v845
    %865 = vmatprep.subr.bf16.mxu0 0
    %866 = vmatpush1.bf16.msra.mxu0 %v844
    %867 = vmatprep.subr.bf16.mxu0 0
    %868 = vmatpush1.bf16.msra.mxu0 %v843
    %869 = vmatprep.subr.bf16.mxu0 0
    %870 = vmatpush1.bf16.msra.mxu0 %v842
    %871 = vmatprep.subr.bf16.mxu0 0
    %872 = vmatpush1.bf16.msra.mxu0 %v841
    %873 = vmatprep.subr.bf16.mxu0 0
    %874 = vmatpush2.bf16.msra.mxu0 0
    %875 = vmatprep.subr.bf16.mxu0 0
    %876 = vmatpush2.bf16.msra.mxu0 0
    %877 = vmatprep.subr.bf16.mxu0 0
    %878 = vmatpush2.bf16.msra.mxu0 0
    %879 = vmatprep.subr.bf16.mxu0 0
    %880 = vmatpush2.bf16.msra.mxu0 0
    %881 = vmatprep.subr.bf16.mxu0 0
    %882 = vmatpush2.bf16.msra.mxu0 0
    %883 = vmatprep.subr.bf16.mxu0 0
    %884 = vmatpush2.bf16.msra.mxu0 0
    %885 = vmatprep.subr.bf16.mxu0 0
    %886 = vmatpush2.bf16.msra.mxu0 0
    %887 = vmatprep.subr.bf16.mxu0 0
    %888 = vmatpush2.bf16.msra.mxu0 0
    %889 = vmatprep.mubr.bf16.mxu0 0
    %890 = vmatmul.mubr.bf16.gmra.mxu0 %v804
    %v891 = vpop.f32.mrf.mxu0
    %v892 = vadd.f32 %v808, %v891
    %v893 = vpop.f32.mrf.mxu0
    %v894 = vpop.f32.mrf.mxu0
    %v895 = vpop.f32.mrf.mxu0
    %896 = vdwg.mxu0
    %v897 = vsub.f32 0.0, %v892
    %v898 = vmul.f32 %v897, 1.442695
    %v899 = vpow.pop %v898
    %v900 = vadd.f32 %v899, 1.0
    %v901 = vrcp.pop %v900
    %v902 = vmul.f32 %v892, %v901
    %v903 = vpack.c.bf16 %v902, %v902
    %v904 = vlaneseq
    %v905 = vshrl.u32 %v904, 7
    %v906 = vsub.s32 0, %v905
    %v907 = vrot.slane %v714, %v906
    %v924 = vunpack.c.l.b16 %v680
    %v925 = vunpack.c.l.b16 %v681
    %v926 = vunpack.c.l.b16 %v682
    %v927 = vunpack.c.l.b16 %v683
    %v928 = vunpack.c.l.b16 %v684
    %v929 = vunpack.c.l.b16 %v685
    %v930 = vunpack.c.l.b16 %v686
    %v931 = vunpack.c.l.b16 %v687
    %v932 = vunpack.c.l.b16 %v688
    %v933 = vunpack.c.l.b16 %v689
    %v934 = vunpack.c.l.b16 %v690
    %v935 = vunpack.c.l.b16 %v691
    %v936 = vunpack.c.l.b16 %v692
    %v937 = vunpack.c.l.b16 %v693
    %v938 = vunpack.c.l.b16 %v694
    %v939 = vunpack.c.l.b16 %v695
    %v940 = vpack.c.b16 %v925, %v924
    %v941 = vpack.c.b16 %v927, %v926
    %v942 = vpack.c.b16 %v929, %v928
    %v943 = vpack.c.b16 %v931, %v930
    %v944 = vpack.c.b16 %v933, %v932
    %v945 = vpack.c.b16 %v935, %v934
    %v946 = vpack.c.b16 %v937, %v936
    %v947 = vpack.c.b16 %v939, %v938
    %956 = vmatprep.subr.bf16.mxu0 0
    %957 = vmatpush1.bf16.msra.mxu0 %v947
    %958 = vmatprep.subr.bf16.mxu0 0
    %959 = vmatpush1.bf16.msra.mxu0 %v946
    %960 = vmatprep.subr.bf16.mxu0 0
    %961 = vmatpush1.bf16.msra.mxu0 %v945
    %962 = vmatprep.subr.bf16.mxu0 0
    %963 = vmatpush1.bf16.msra.mxu0 %v944
    %964 = vmatprep.subr.bf16.mxu0 0
    %965 = vmatpush1.bf16.msra.mxu0 %v943
    %966 = vmatprep.subr.bf16.mxu0 0
    %967 = vmatpush1.bf16.msra.mxu0 %v942
    %968 = vmatprep.subr.bf16.mxu0 0
    %969 = vmatpush1.bf16.msra.mxu0 %v941
    %970 = vmatprep.subr.bf16.mxu0 0
    %971 = vmatpush1.bf16.msra.mxu0 %v940
    %972 = vmatprep.subr.bf16.mxu0 0
    %973 = vmatpush2.bf16.msra.mxu0 0
    %974 = vmatprep.subr.bf16.mxu0 0
    %975 = vmatpush2.bf16.msra.mxu0 0
    %976 = vmatprep.subr.bf16.mxu0 0
    %977 = vmatpush2.bf16.msra.mxu0 0
    %978 = vmatprep.subr.bf16.mxu0 0
    %979 = vmatpush2.bf16.msra.mxu0 0
    %980 = vmatprep.subr.bf16.mxu0 0
    %981 = vmatpush2.bf16.msra.mxu0 0
    %982 = vmatprep.subr.bf16.mxu0 0
    %983 = vmatpush2.bf16.msra.mxu0 0
    %984 = vmatprep.subr.bf16.mxu0 0
    %985 = vmatpush2.bf16.msra.mxu0 0
    %986 = vmatprep.subr.bf16.mxu0 0
    %987 = vmatpush2.bf16.msra.mxu0 0
    %988 = vmatprep.mubr.bf16.mxu0 0
    %989 = vmatmul.mubr.bf16.gmra.mxu0 %v903
    %v990 = vpop.f32.mrf.mxu0
    %v991 = vadd.f32 %v907, %v990
    %v992 = vpop.f32.mrf.mxu0
    %v993 = vpop.f32.mrf.mxu0
    %v994 = vpop.f32.mrf.mxu0
    %995 = vdwg.mxu0
    %v996 = vpack.c.bf16 %v991, %v991
    %v997 = vlaneseq
    %v998 = vshrl.u32 %v997, 7
    %v999 = vsub.s32 0, %v998
    %v1000 = vrot.slane %v715, %v999
    %v1017 = vunpack.c.l.b16 %v696
    %v1018 = vunpack.c.l.b16 %v697
    %v1019 = vunpack.c.l.b16 %v698
    %v1020 = vunpack.c.l.b16 %v699
    %v1021 = vunpack.c.l.b16 %v700
    %v1022 = vunpack.c.l.b16 %v701
    %v1023 = vunpack.c.l.b16 %v702
    %v1024 = vunpack.c.l.b16 %v703
    %v1025 = vunpack.c.l.b16 %v704
    %v1026 = vunpack.c.l.b16 %v705
    %v1027 = vunpack.c.l.b16 %v706
    %v1028 = vunpack.c.l.b16 %v707
    %v1029 = vunpack.c.l.b16 %v708
    %v1030 = vunpack.c.l.b16 %v709
    %v1031 = vunpack.c.l.b16 %v710
    %v1032 = vunpack.c.l.b16 %v711
    %v1033 = vpack.c.b16 %v1018, %v1017
    %v1034 = vpack.c.b16 %v1020, %v1019
    %v1035 = vpack.c.b16 %v1022, %v1021
    %v1036 = vpack.c.b16 %v1024, %v1023
    %v1037 = vpack.c.b16 %v1026, %v1025
    %v1038 = vpack.c.b16 %v1028, %v1027
    %v1039 = vpack.c.b16 %v1030, %v1029
    %v1040 = vpack.c.b16 %v1032, %v1031
    %1049 = vmatprep.subr.bf16.mxu0 0
    %1050 = vmatpush1.bf16.msra.mxu0 %v1040
    %1051 = vmatprep.subr.bf16.mxu0 0
    %1052 = vmatpush1.bf16.msra.mxu0 %v1039
    %1053 = vmatprep.subr.bf16.mxu0 0
    %1054 = vmatpush1.bf16.msra.mxu0 %v1038
    %1055 = vmatprep.subr.bf16.mxu0 0
    %1056 = vmatpush1.bf16.msra.mxu0 %v1037
    %1057 = vmatprep.subr.bf16.mxu0 0
    %1058 = vmatpush1.bf16.msra.mxu0 %v1036
    %1059 = vmatprep.subr.bf16.mxu0 0
    %1060 = vmatpush1.bf16.msra.mxu0 %v1035
    %1061 = vmatprep.subr.bf16.mxu0 0
    %1062 = vmatpush1.bf16.msra.mxu0 %v1034
    %1063 = vmatprep.subr.bf16.mxu0 0
    %1064 = vmatpush1.bf16.msra.mxu0 %v1033
    %1065 = vmatprep.subr.bf16.mxu0 0
    %1066 = vmatpush2.bf16.msra.mxu0 0
    %1067 = vmatprep.subr.bf16.mxu0 0
    %1068 = vmatpush2.bf16.msra.mxu0 0
    %1069 = vmatprep.subr.bf16.mxu0 0
    %1070 = vmatpush2.bf16.msra.mxu0 0
    %1071 = vmatprep.subr.bf16.mxu0 0
    %1072 = vmatpush2.bf16.msra.mxu0 0
    %1073 = vmatprep.subr.bf16.mxu0 0
    %1074 = vmatpush2.bf16.msra.mxu0 0
    %1075 = vmatprep.subr.bf16.mxu0 0
    %1076 = vmatpush2.bf16.msra.mxu0 0
    %1077 = vmatprep.subr.bf16.mxu0 0
    %1078 = vmatpush2.bf16.msra.mxu0 0
    %1079 = vmatprep.subr.bf16.mxu0 0
    %1080 = vmatpush2.bf16.msra.mxu0 0
    %1081 = vmatprep.mubr.bf16.mxu0 0
    %1082 = vmatmul.mubr.bf16.gmra.mxu0 %v996
    %v1083 = vpop.f32.mrf.mxu0
    %v1084 = vadd.f32 %v1000, %v1083
    %v1085 = vpop.f32.mrf.mxu0
    %v1086 = vpop.f32.mrf.mxu0
    %v1087 = vpop.f32.mrf.mxu0
    %1088 = vdwg.mxu0
    %v1089 = vadd.f32 %v1084, %v773
    %1090 = vadd.xlane.f32.xlu0 %v1089
    %v1091 = vpop.xlane.xlu0 %1090
    %v1092 = vmul.f32 %v1091, %v639
    %v1093 = vsub.f32 %v1089, %v1092
    %v1094 = vmul.f32 %v1093, %v1093
    %1095 = vadd.xlane.f32.xlu0 %v1094
    %v1096 = vpop.xlane.xlu0 %1095
    %v1097 = vmul.f32 %v1096, %v639
    %v1098 = vadd.f32 %v1097, 1e-05
    %v1099 = vrsqrt.pop %v1098
    %v1100 = vmul.f32 %v1093, %v1099
    %v1101 = vlaneseq
    %v1102 = vshrl.u32 %v1101, 7
    %v1103 = vsub.s32 0, %v1102
    %v1104 = vrot.slane %v716, %v1103
    %v1105 = vmul.f32 %v1100, %v1104
    %v1106 = vlaneseq
    %v1107 = vshrl.u32 %v1106, 7
    %v1108 = vsub.s32 0, %v1107
    %v1109 = vrot.slane %v717, %v1108
    %v1110 = vadd.f32 %v1105, %v1109
    %1111 = vmatprep.subr.mxu0 0.0
    %1112 = vmatpush1.xpose.msra.mxu0 0.0
    %1113 = vmatprep.subr.mxu0 0.0
    %1114 = vmatpush1.xpose.msra.mxu0 0.0
    %1115 = vmatprep.subr.mxu0 0.0
    %1116 = vmatpush1.xpose.msra.mxu0 0.0
    %1117 = vmatprep.subr.mxu0 0.0
    %1118 = vmatpush1.xpose.msra.mxu0 0.0
    %1119 = vmatprep.subr.mxu0 0.0
    %1120 = vmatpush1.xpose.msra.mxu0 0.0
    %1121 = vmatprep.subr.mxu0 0.0
    %1122 = vmatpush1.xpose.msra.mxu0 0.0
    %1123 = vmatprep.subr.mxu0 0.0
    %1124 = vmatpush1.xpose.msra.mxu0 0.0
    %1125 = vmatprep.subr.mxu0 0.0
    %1126 = vmatpush1.xpose.msra.mxu0 0.0
    %1127 = vmatprep.subr.mxu0 0.0
    %1128 = vmatpush1.xpose.msra.mxu0 0.0
    %1129 = vmatprep.subr.mxu0 0.0
    %1130 = vmatpush1.xpose.msra.mxu0 0.0
    %1131 = vmatprep.subr.mxu0 0.0
    %1132 = vmatpush1.xpose.msra.mxu0 0.0
    %1133 = vmatprep.subr.mxu0 0.0
    %1134 = vmatpush1.xpose.msra.mxu0 0.0
    %1135 = vmatprep.subr.mxu0 0.0
    %1136 = vmatpush1.xpose.msra.mxu0 0.0
    %1137 = vmatprep.subr.mxu0 0.0
    %1138 = vmatpush1.xpose.msra.mxu0 0.0
    %1139 = vmatprep.subr.mxu0 0.0
    %1140 = vmatpush1.xpose.msra.mxu0 0.0
    %1141 = vmatprep.subr.mxu0 0.0
    %1142 = vmatpush1.xpose.msra.mxu0 %v658
    %1143 = vmatprep.subr.mxu0 0.0
    %1144 = vmatpush2.xpose.msra.mxu0 0.0
    %1145 = vmatprep.subr.mxu0 0.0
    %1146 = vmatpush2.xpose.msra.mxu0 0.0
    %1147 = vmatprep.subr.mxu0 0.0
    %1148 = vmatpush2.xpose.msra.mxu0 0.0
    %1149 = vmatprep.subr.mxu0 0.0
    %1150 = vmatpush2.xpose.msra.mxu0 0.0
    %1151 = vmatprep.subr.mxu0 0.0
    %1152 = vmatpush2.xpose.msra.mxu0 0.0
    %1153 = vmatprep.subr.mxu0 0.0
    %1154 = vmatpush2.xpose.msra.mxu0 0.0
    %1155 = vmatprep.subr.mxu0 0.0
    %1156 = vmatpush2.xpose.msra.mxu0 0.0
    %1157 = vmatprep.subr.mxu0 0.0
    %1158 = vmatpush2.xpose.msra.mxu0 0.0
    %1159 = vmatprep.subr.mxu0 0.0
    %1160 = vmatpush2.xpose.msra.mxu0 0.0
    %1161 = vmatprep.subr.mxu0 0.0
    %1162 = vmatpush2.xpose.msra.mxu0 0.0
    %1163 = vmatprep.subr.mxu0 0.0
    %1164 = vmatpush2.xpose.msra.mxu0 0.0
    %1165 = vmatprep.subr.mxu0 0.0
    %1166 = vmatpush2.xpose.msra.mxu0 0.0
    %1167 = vmatprep.subr.mxu0 0.0
    %1168 = vmatpush2.xpose.msra.mxu0 0.0
    %1169 = vmatprep.subr.mxu0 0.0
    %1170 = vmatpush2.xpose.msra.mxu0 0.0
    %1171 = vmatprep.subr.mxu0 0.0
    %1172 = vmatpush2.xpose.msra.mxu0 0.0
    %1173 = vmatprep.subr.mxu0 0.0
    %1174 = vmatpush2.xpose.msra.mxu0 0.0
    %1175 = vmatprep.mubr.f32.mxu0 0.0
    %1176 = vmatmul.mubr.f32.gmra.mxu0 %v1110
    %v1177 = vpop.f32.mrf.mxu0
    %v1178 = vadd.f32 0.0, %v1177
    %v1179 = vpop.f32.mrf.mxu0
    %1180 = vdwg.mxu0
    %1181 = vmatprep.subr.mxu0 0.0
    %1182 = vmatpush1.xpose.msra.mxu0 0.0
    %1183 = vmatprep.subr.mxu0 0.0
    %1184 = vmatpush1.xpose.msra.mxu0 0.0
    %1185 = vmatprep.subr.mxu0 0.0
    %1186 = vmatpush1.xpose.msra.mxu0 0.0
    %1187 = vmatprep.subr.mxu0 0.0
    %1188 = vmatpush1.xpose.msra.mxu0 0.0
    %1189 = vmatprep.subr.mxu0 0.0
    %1190 = vmatpush1.xpose.msra.mxu0 0.0
    %1191 = vmatprep.subr.mxu0 0.0
    %1192 = vmatpush1.xpose.msra.mxu0 0.0
    %1193 = vmatprep.subr.mxu0 0.0
    %1194 = vmatpush1.xpose.msra.mxu0 0.0
    %1195 = vmatprep.subr.mxu0 0.0
    %1196 = vmatpush1.xpose.msra.mxu0 0.0
    %1197 = vmatprep.subr.mxu0 0.0
    %1198 = vmatpush1.xpose.msra.mxu0 0.0
    %1199 = vmatprep.subr.mxu0 0.0
    %1200 = vmatpush1.xpose.msra.mxu0 0.0
    %1201 = vmatprep.subr.mxu0 0.0
    %1202 = vmatpush1.xpose.msra.mxu0 0.0
    %1203 = vmatprep.subr.mxu0 0.0
    %1204 = vmatpush1.xpose.msra.mxu0 0.0
    %1205 = vmatprep.subr.mxu0 0.0
    %1206 = vmatpush1.xpose.msra.mxu0 0.0
    %1207 = vmatprep.subr.mxu0 0.0
    %1208 = vmatpush1.xpose.msra.mxu0 0.0
    %1209 = vmatprep.subr.mxu0 0.0
    %1210 = vmatpush1.xpose.msra.mxu0 0.0
    %1211 = vmatprep.subr.mxu0 0.0
    %1212 = vmatpush1.xpose.msra.mxu0 %v1110
    %1213 = vmatprep.subr.mxu0 0.0
    %1214 = vmatpush2.xpose.msra.mxu0 0.0
    %1215 = vmatprep.subr.mxu0 0.0
    %1216 = vmatpush2.xpose.msra.mxu0 0.0
    %1217 = vmatprep.subr.mxu0 0.0
    %1218 = vmatpush2.xpose.msra.mxu0 0.0
    %1219 = vmatprep.subr.mxu0 0.0
    %1220 = vmatpush2.xpose.msra.mxu0 0.0
    %1221 = vmatprep.subr.mxu0 0.0
    %1222 = vmatpush2.xpose.msra.mxu0 0.0
    %1223 = vmatprep.subr.mxu0 0.0
    %1224 = vmatpush2.xpose.msra.mxu0 0.0
    %1225 = vmatprep.subr.mxu0 0.0
    %1226 = vmatpush2.xpose.msra.mxu0 0.0
    %1227 = vmatprep.subr.mxu0 0.0
    %1228 = vmatpush2.xpose.msra.mxu0 0.0
    %1229 = vmatprep.subr.mxu0 0.0
    %1230 = vmatpush2.xpose.msra.mxu0 0.0
    %1231 = vmatprep.subr.mxu0 0.0
    %1232 = vmatpush2.xpose.msra.mxu0 0.0
    %1233 = vmatprep.subr.mxu0 0.0
    %1234 = vmatpush2.xpose.msra.mxu0 0.0
    %1235 = vmatprep.subr.mxu0 0.0
    %1236 = vmatpush2.xpose.msra.mxu0 0.0
    %1237 = vmatprep.subr.mxu0 0.0
    %1238 = vmatpush2.xpose.msra.mxu0 0.0
    %1239 = vmatprep.subr.mxu0 0.0
    %1240 = vmatpush2.xpose.msra.mxu0 0.0
    %1241 = vmatprep.subr.mxu0 0.0
    %1242 = vmatpush2.xpose.msra.mxu0 0.0
    %1243 = vmatprep.subr.mxu0 0.0
    %1244 = vmatpush2.xpose.msra.mxu0 0.0
    %1245 = vmatprep.mubr.f32.mxu0 0.0
    %1246 = vmatmul.mubr.f32.gmra.mxu0 %v1110
    %v1247 = vpop.f32.mrf.mxu0
    %v1248 = vadd.f32 0.0, %v1247
    %v1249 = vpop.f32.mrf.mxu0
    %1250 = vdwg.mxu0
    %1251 = vmatprep.subr.mxu0 0.0
    %1252 = vmatpush1.xpose.msra.mxu0 0.0
    %1253 = vmatprep.subr.mxu0 0.0
    %1254 = vmatpush1.xpose.msra.mxu0 0.0
    %1255 = vmatprep.subr.mxu0 0.0
    %1256 = vmatpush1.xpose.msra.mxu0 0.0
    %1257 = vmatprep.subr.mxu0 0.0
    %1258 = vmatpush1.xpose.msra.mxu0 0.0
    %1259 = vmatprep.subr.mxu0 0.0
    %1260 = vmatpush1.xpose.msra.mxu0 0.0
    %1261 = vmatprep.subr.mxu0 0.0
    %1262 = vmatpush1.xpose.msra.mxu0 0.0
    %1263 = vmatprep.subr.mxu0 0.0
    %1264 = vmatpush1.xpose.msra.mxu0 0.0
    %1265 = vmatprep.subr.mxu0 0.0
    %1266 = vmatpush1.xpose.msra.mxu0 0.0
    %1267 = vmatprep.subr.mxu0 0.0
    %1268 = vmatpush1.xpose.msra.mxu0 0.0
    %1269 = vmatprep.subr.mxu0 0.0
    %1270 = vmatpush1.xpose.msra.mxu0 0.0
    %1271 = vmatprep.subr.mxu0 0.0
    %1272 = vmatpush1.xpose.msra.mxu0 0.0
    %1273 = vmatprep.subr.mxu0 0.0
    %1274 = vmatpush1.xpose.msra.mxu0 0.0
    %1275 = vmatprep.subr.mxu0 0.0
    %1276 = vmatpush1.xpose.msra.mxu0 0.0
    %1277 = vmatprep.subr.mxu0 0.0
    %1278 = vmatpush1.xpose.msra.mxu0 0.0
    %1279 = vmatprep.subr.mxu0 0.0
    %1280 = vmatpush1.xpose.msra.mxu0 0.0
    %1281 = vmatprep.subr.mxu0 0.0
    %1282 = vmatpush1.xpose.msra.mxu0 %v658
    %1283 = vmatprep.subr.mxu0 0.0
    %1284 = vmatpush2.xpose.msra.mxu0 0.0
    %1285 = vmatprep.subr.mxu0 0.0
    %1286 = vmatpush2.xpose.msra.mxu0 0.0
    %1287 = vmatprep.subr.mxu0 0.0
    %1288 = vmatpush2.xpose.msra.mxu0 0.0
    %1289 = vmatprep.subr.mxu0 0.0
    %1290 = vmatpush2.xpose.msra.mxu0 0.0
    %1291 = vmatprep.subr.mxu0 0.0
    %1292 = vmatpush2.xpose.msra.mxu0 0.0
    %1293 = vmatprep.subr.mxu0 0.0
    %1294 = vmatpush2.xpose.msra.mxu0 0.0
    %1295 = vmatprep.subr.mxu0 0.0
    %1296 = vmatpush2.xpose.msra.mxu0 0.0
    %1297 = vmatprep.subr.mxu0 0.0
    %1298 = vmatpush2.xpose.msra.mxu0 0.0
    %1299 = vmatprep.subr.mxu0 0.0
    %1300 = vmatpush2.xpose.msra.mxu0 0.0
    %1301 = vmatprep.subr.mxu0 0.0
    %1302 = vmatpush2.xpose.msra.mxu0 0.0
    %1303 = vmatprep.subr.mxu0 0.0
    %1304 = vmatpush2.xpose.msra.mxu0 0.0
    %1305 = vmatprep.subr.mxu0 0.0
    %1306 = vmatpush2.xpose.msra.mxu0 0.0
    %1307 = vmatprep.subr.mxu0 0.0
    %1308 = vmatpush2.xpose.msra.mxu0 0.0
    %1309 = vmatprep.subr.mxu0 0.0
    %1310 = vmatpush2.xpose.msra.mxu0 0.0
    %1311 = vmatprep.subr.mxu0 0.0
    %1312 = vmatpush2.xpose.msra.mxu0 0.0
    %1313 = vmatprep.subr.mxu0 0.0
    %1314 = vmatpush2.xpose.msra.mxu0 0.0
    %1315 = vmatprep.mubr.f32.mxu0 0.0
    %1316 = vmatmul.mubr.f32.gmra.mxu0 %v658
    %v1317 = vpop.f32.mrf.mxu0
    %v1318 = vadd.f32 %v1248, %v1317
    %v1319 = vpop.f32.mrf.mxu0
    %1320 = vdwg.mxu0
    %v1321 = vmul.f32 %v1318, 0.5
    %vm1322 = vcmask 64512
    %v1323 = vsel %vm1322, %v1321, -inf
    %1324 = vmax.xlane.f32.xlu0 %v1323
    %v1325 = vpop.xlane.xlu0 %1324
    %v1326 = vsub.f32 %v1321, %v1325
    %v1327 = vmul.f32 %v1326, 1.442695
    %v1328 = vpow.pop %v1327
    %v1329 = vsel %vm1322, %v1328, 0.0
    %1330 = vadd.xlane.f32.xlu0 %v1329
    %v1331 = vpop.xlane.xlu0 %1330
    %v1332 = vrcp.pop %v1331
    %v1333 = vmul.f32 %v1328, %v1332
    %v1334 = vsel %vm1322, %v1178, -inf
    %1335 = vmax.xlane.f32.xlu0 %v1334
    %v1336 = vpop.xlane.xlu0 %1335
    %v1337 = vsub.f32 %v1178, %v1336
    %v1338 = vmul.f32 %v1337, 1.442695
    %v1339 = vpow.pop %v1338
    %v1340 = vsel %vm1322, %v1339, 0.0
    %1341 = vadd.xlane.f32.xlu0 %v1340
    %v1342 = vpop.xlane.xlu0 %1341
    %v1343 = vlog2.pop %v1342
    %v1344 = vmul.f32 %v1343, 0.6931472
    %v1345 = vsub.f32 %v1337, %v1344
    %v1346 = vrot.slane %v1334, 4
    %v1347 = vmax.f32 %v1334, %v1346
    %v1348 = vrot.slane %v1347, 2
    %v1349 = vmax.f32 %v1347, %v1348
    %v1350 = vrot.slane %v1349, 1
    %v1351 = vmax.f32 %v1349, %v1350
    %v1352 = vsub.f32 %v1178, %v1351
    %v1353 = vmul.f32 %v1352, 1.442695
    %v1354 = vpow.pop %v1353
    %v1355 = vsel %vm1322, %v1354, 0.0
    %v1356 = vrot.slane %v1355, 4
    %v1357 = vadd.f32 %v1355, %v1356
    %v1358 = vrot.slane %v1357, 2
    %v1359 = vadd.f32 %v1357, %v1358
    %v1360 = vrot.slane %v1359, 1
    %v1361 = vadd.f32 %v1359, %v1360
    %v1362 = vlog2.pop %v1361
    %v1363 = vmul.f32 %v1362, 0.6931472
    %v1364 = vsub.f32 %v1352, %v1363
    %v1365 = vsub.f32 0.0, %v1333
    %v1366 = vadd.f32 %v1345, %v1364
    %v1367 = vmul.f32 %v1365, %v1366
    %v1368 = vsel %vm1322, %v1367, 0.0
    %1369 = vadd.xlane.f32.xlu0 %v1368
    %v1370 = vpop.xlane.xlu0 %1369
    %v1371 = vrot.slane %v1370, 4
    %v1372 = vadd.f32 %v1370, %v1371
    %v1373 = vrot.slane %v1372, 2
    %v1374 = vadd.f32 %v1372, %v1373
    %v1375 = vrot.slane %v1374, 1
    %v1376 = vadd.f32 %v1374, %v1375
    %v1377 = vmul.f32 %v1376, 0.0625
    %vm1378 = vcmask 0
    %1379 = vst.msk [vmem:[#allocation13] sm:$0x1] %vm1378, %v1377
    // Predicated region
    $region54: #{tpu_custom_call.1} parent=1 // pred_check
      _
    $region55: #{tpu_custom_call.1} parent=1 // pred_check_branch
      %1381 = sbr.rel (0) target = $region57
    $region56: #{tpu_custom_call.1} parent=1 // pred_region
      %s1383 = ssub.s32 16, 16
      %1384 = vsyncadd [#allocation4], %s1383
      %s1386 = sshll.u32 [#allocation13], 4
      %s1387 = int_to_ptr.vmem [resolvable:$true] %s1386
      %1389 = dma.vmem_to_hbm [thread:$0]  %s1387, 16, %s7, [#allocation4]
    $region57: #{tpu_custom_call.1} parent=1 // pred_fallthru
      _
    // Predicated region
    $region58: #{tpu_custom_call.1} parent=1 // pred_check
      _
    $region59: #{tpu_custom_call.1} parent=1 // pred_check_branch
      %1391 = sbr.rel (0) target = $region61
    $region60: #{tpu_custom_call.1} parent=1 // pred_region
      %1392 = dma.done [#allocation4], 16
    $region61: #{tpu_custom_call.1} parent=1 // pred_fallthru
      _
    %1393 = vsyncpa [#allocation3], 1
    %1394 = vsyncpa [#allocation6], 1
    %1395 = vsyncpa [#allocation9], 1
    %1396 = vsyncpa [#allocation12], 1
    %1397 = vsyncpa [#allocation4], 1

</llo_original>
